<compile_context>
chip_gen: v7x
topology: tpu7x:2x2x1
jax: 0.10.0
libtpu: 0.0.40
codegen_flags: <defaults>
</compile_context>

<pallas_src>
import jax
import jax.numpy as jnp
from jax.experimental import pallas as pl
from jax.experimental.pallas import tpu as pltpu


# ----------------------------------------------------------------------------
# Kernel
# ----------------------------------------------------------------------------
def mlp_kernel(x_ref, w1_ref, b1_ref, w2_ref, b2_ref, o_ref):
    # Layer 1: Linear(1000 -> width) + ReLU (+ eval-mode Dropout == identity).
    h = jnp.dot(x_ref[...], w1_ref[...], preferred_element_type=jnp.float32)
    h = jnp.maximum(h + b1_ref[...], 0.0)          # bias-add / ReLU in f32

    # Layer 2: Linear(width -> 1000).  Hidden goes through the MXU in bf16,
    # accumulation stays f32.
    y = jnp.dot(h.astype(jnp.bfloat16), w2_ref[...],
                preferred_element_type=jnp.float32)
    o_ref[...] = (y + b2_ref[...]).astype(o_ref.dtype)


# ----------------------------------------------------------------------------
# Helpers
# ----------------------------------------------------------------------------
def _round_up(x, m):
    return (x + m - 1) // m * m


def _pad_to(a, axis, target):
    pad = target - a.shape[axis]
    if pad == 0:
        return a
    widths = [(0, 0)] * a.ndim
    widths[axis] = (0, pad)
    return jnp.pad(a, widths)


def _is_v5e():
    try:
        kind = jax.devices()[0].device_kind.lower()
    except Exception:
        return False
    return ("v5e" in kind) or ("v5 lite" in kind) or ("v5litepod" in kind)


def _vmem_limit_bytes():
    # Generation-aware scoped-VMEM limit: half the physical VMEM
    # (=> 64 MiB on v5e/v6e's 128 MiB, 32 MiB on v7x's 64 MiB).
    try:
        cap = pltpu.get_tpu_info().vmem_capacity_bytes
    except Exception:
        cap = 64 * 1024 * 1024
    return max(32 * 1024 * 1024, cap // 2)


def _pick_batch_tile(B):
    # v6e/v7x MXUs are 256 wide -> feed 256 batch rows per tile at large B;
    # v5e's MXU is 128 wide -> 128 is enough there.
    max_tb = 128 if _is_v5e() else 256
    if B <= max_tb:
        tb = _round_up(B, 8)      # single batch tile (block == full dim)
        return tb, tb
    b_p = _round_up(B, max_tb)
    return max_tb, b_p


# ----------------------------------------------------------------------------
# One-time weight preparation (do NOT call per forward)
# ----------------------------------------------------------------------------
def prepare_params(w1, b1, w2, b2):
    """Pad weights to lane-dense (x128) shapes and cast to bf16, ONCE.

    The returned dict is what `mlp_forward` consumes; preparing it once at
    model-load time keeps the kernel's HBM traffic at exactly one read of the
    bf16 weights per call (the old per-call pad/cast cost 2-3x extra traffic).
    """
    d_in, width = w1.shape
    d_out = w2.shape[1]
    d_in_p = _round_up(d_in, 128)
    width_p = _round_up(width, 128)
    d_out_p = _round_up(d_out, 128)

    w1p = _pad_to(_pad_to(w1.astype(jnp.bfloat16), 0, d_in_p), 1, width_p)
    b1p = _pad_to(b1.reshape(1, -1).astype(jnp.float32), 1, width_p)
    w2p = _pad_to(_pad_to(w2.astype(jnp.bfloat16), 0, width_p), 1, d_out_p)
    b2p = _pad_to(b2.reshape(1, -1).astype(jnp.float32), 1, d_out_p)
    return {
        "w1": w1p, "b1": b1p, "w2": w2p, "b2": b2p,
        "d_in": d_in, "d_out": d_out,
    }


# ----------------------------------------------------------------------------
# Forward
# ----------------------------------------------------------------------------
def mlp_forward(x, params):
    w1p, b1p, w2p, b2p = params["w1"], params["b1"], params["w2"], params["b2"]
    d_in, d_out = params["d_in"], params["d_out"]

    B = x.shape[0]
    d_in_p, width_p = w1p.shape
    d_out_p = w2p.shape[1]

    tb, b_p = _pick_batch_tile(B)

    # Only the (small) activation is padded/cast per call; weights were
    # prepared once in prepare_params.
    xp = _pad_to(_pad_to(x.astype(jnp.bfloat16), 1, d_in_p), 0, b_p)

    grid = (b_p // tb,)

    flops = 2 * b_p * (d_in_p * width_p + width_p * d_out_p)
    # Resident weights are read exactly once; x read once; output written once.
    bytes_accessed = (xp.size * 2 + w1p.size * 2 + w2p.size * 2
                      + b1p.size * 4 + b2p.size * 4 + b_p * d_out_p * 4)

    out = pl.pallas_call(
        mlp_kernel,
        out_shape=jax.ShapeDtypeStruct((b_p, d_out_p), jnp.float32),
        grid_spec=pltpu.PrefetchScalarGridSpec(
            num_scalar_prefetch=0,
            grid=grid,
            in_specs=[
                # x: one lane-dense batch tile per grid step.
                pl.BlockSpec((tb, d_in_p), lambda b: (b, 0)),
                # Weights/biases: constant block index -> DMA'd once, held
                # resident in VMEM across all batch tiles.
                pl.BlockSpec((d_in_p, width_p), lambda b: (0, 0)),
                pl.BlockSpec((1, width_p), lambda b: (0, 0)),
                pl.BlockSpec((width_p, d_out_p), lambda b: (0, 0)),
                pl.BlockSpec((1, d_out_p), lambda b: (0, 0)),
            ],
            out_specs=pl.BlockSpec((tb, d_out_p), lambda b: (b, 0)),
        ),
        compiler_params=pltpu.CompilerParams(
            dimension_semantics=("parallel",),   # batch tiles are independent
            vmem_limit_bytes=_vmem_limit_bytes(),
        ),
        cost_estimate=pl.CostEstimate(
            flops=flops, transcendentals=0, bytes_accessed=bytes_accessed),
    )(xp, w1p, b1p, w2p, b2p)

    # Padded batch rows / output columns carry garbage/zeros by construction;
    # always consume the sliced view, never the padded buffer directly.
    return out[:B, :d_out]


# ----------------------------------------------------------------------------
# Init + reference (mirrors the kernel's bf16/f32 precision path)
# ----------------------------------------------------------------------------
def init_params(key, d_in=1000, width=2048, d_out=1000):
    # kaiming_normal_(a=0, mode='fan_in') => std = sqrt(2 / fan_in); bias = 0
    k1, k2 = jax.random.split(key)
    w1 = jax.random.normal(k1, (d_in, width), jnp.float32) * jnp.sqrt(2.0 / d_in)
    b1 = jnp.zeros((width,), jnp.float32)
    w2 = jax.random.normal(k2, (width, d_out), jnp.float32) * jnp.sqrt(2.0 / width)
    b2 = jnp.zeros((d_out,), jnp.float32)
    return w1, b1, w2, b2


def ref_forward(x, w1, b1, w2, b2):
    f32 = jnp.float32
    xb = x.astype(jnp.bfloat16).astype(f32)
    w1b = w1.astype(jnp.bfloat16).astype(f32)
    w2b = w2.astype(jnp.bfloat16).astype(f32)
    h = jnp.maximum(xb @ w1b + b1.reshape(1, -1), 0.0)
    hb = h.astype(jnp.bfloat16).astype(f32)
    return hb @ w2b + b2.reshape(1, -1)


if __name__ == "__main__":
    key = jax.random.PRNGKey(0)
    kx, kp = jax.random.split(key)

    batch = 8
    d_in = 1000     # fixed by the module (Linear(1000, width))
    width = 256     # small "width" for the synthetic test (module default 2048)
    d_out = 1000

    x = jax.random.normal(kx, (batch, d_in), jnp.float32)
    w1, b1, w2, b2 = init_params(kp, d_in, width, d_out)

    # Weights are padded/cast ONCE, outside the per-call path.
    params = prepare_params(w1, b1, w2, b2)
    jax.block_until_ready(params["w1"])

    out = mlp_forward(x, params)
    jax.block_until_ready(out)

    ref = ref_forward(x, w1, b1, w2, b2)
    assert out.shape == (batch, d_out)
    assert jnp.allclose(out, ref, atol=1e-2, rtol=1e-2), float(
        jnp.max(jnp.abs(out - ref)))

    print("KERNEL_OK")
</pallas_src>

<mosaic_0001>
module attributes {stable_mosaic.version = 11 : i64} {
  func.func @mlp_kernel(%arg0: i32, %arg1: memref<8x1024xbf16, #tpu.memory_space<vmem>>, %arg2: memref<1024x256xbf16, #tpu.memory_space<vmem>>, %arg3: memref<1x256xf32, #tpu.memory_space<vmem>>, %arg4: memref<256x1024xbf16, #tpu.memory_space<vmem>>, %arg5: memref<1x1024xf32, #tpu.memory_space<vmem>>, %arg6: memref<8x1024xf32, #tpu.memory_space<vmem>>) attributes {dimension_semantics = [#tpu.dimension_semantics<parallel>], iteration_bounds = array<i64: 1>, scalar_prefetch = 0 : i64, scratch_operands = 0 : i64, tpu.core_type = #tpu.core_type<tc>, window_params = [{transform_indices = @transform_0, window_bounds = array<i64: 8, 1024>}, {pipeline_mode = #tpu.pipeline_mode<synchronous>, transform_indices = @transform_1, window_bounds = array<i64: 1024, 256>}, {pipeline_mode = #tpu.pipeline_mode<synchronous>, transform_indices = @transform_2, window_bounds = array<i64: 1, 256>}, {pipeline_mode = #tpu.pipeline_mode<synchronous>, transform_indices = @transform_3, window_bounds = array<i64: 256, 1024>}, {pipeline_mode = #tpu.pipeline_mode<synchronous>, transform_indices = @transform_4, window_bounds = array<i64: 1, 1024>}, {transform_indices = @transform_5, window_bounds = array<i64: 8, 1024>}]} {
    %c0 = arith.constant 0 : index
    %c0_0 = arith.constant 0 : index
    %0 = vector.load %arg1[%c0, %c0_0] : memref<8x1024xbf16, #tpu.memory_space<vmem>>, vector<8x1024xbf16>
    %c0_1 = arith.constant 0 : index
    %c0_2 = arith.constant 0 : index
    %1 = vector.load %arg2[%c0_1, %c0_2] : memref<1024x256xbf16, #tpu.memory_space<vmem>>, vector<1024x256xbf16>
    %cst = arith.constant dense<0.000000e+00> : vector<8x256xf32>
    %2 = tpu.matmul %0, %1, %cst {dimension_numbers = #tpu.dot_dimension_numbers<[1], [0], [0], [1], [0, 0, 1, 1], [], []>} : vector<8x1024xbf16>, vector<1024x256xbf16>, vector<8x256xf32> -> vector<8x256xf32>
    %c0_3 = arith.constant 0 : index
    %c0_4 = arith.constant 0 : index
    %3 = vector.load %arg3[%c0_3, %c0_4] : memref<1x256xf32, #tpu.memory_space<vmem>>, vector<1x256xf32>
    %4 = vector.broadcast %3 : vector<1x256xf32> to vector<8x256xf32>
    %5 = arith.addf %2, %4 : vector<8x256xf32>
    %cst_5 = arith.constant 0.000000e+00 : f32
    %6 = vector.broadcast %cst_5 : f32 to vector<8x256xf32>
    %7 = arith.maximumf %5, %6 : vector<8x256xf32>
    %8 = arith.truncf %7 : vector<8x256xf32> to vector<8x256xbf16>
    %c0_6 = arith.constant 0 : index
    %c0_7 = arith.constant 0 : index
    %9 = vector.load %arg4[%c0_6, %c0_7] : memref<256x1024xbf16, #tpu.memory_space<vmem>>, vector<256x1024xbf16>
    %cst_8 = arith.constant dense<0.000000e+00> : vector<8x1024xf32>
    %10 = tpu.matmul %8, %9, %cst_8 {dimension_numbers = #tpu.dot_dimension_numbers<[1], [0], [0], [1], [0, 0, 1, 1], [], []>} : vector<8x256xbf16>, vector<256x1024xbf16>, vector<8x1024xf32> -> vector<8x1024xf32>
    %c0_9 = arith.constant 0 : index
    %c0_10 = arith.constant 0 : index
    %11 = vector.load %arg5[%c0_9, %c0_10] : memref<1x1024xf32, #tpu.memory_space<vmem>>, vector<1x1024xf32>
    %12 = vector.broadcast %11 : vector<1x1024xf32> to vector<8x1024xf32>
    %13 = arith.addf %10, %12 : vector<8x1024xf32>
    %c0_11 = arith.constant 0 : index
    %c0_12 = arith.constant 0 : index
    %14 = vector.load %arg6[%c0_11, %c0_12] : memref<8x1024xf32, #tpu.memory_space<vmem>>, vector<8x1024xf32>
    tpu.vector_store %arg6[%c0_11, %c0_12], %13 {strides = array<i32>} : memref<8x1024xf32, #tpu.memory_space<vmem>>, vector<8x1024xf32>,
    return
  }
  func.func @transform_0(%arg0: i32) -> (i32, i32) {
    %c0_i32 = arith.constant 0 : i32
    %c0_i32_0 = arith.constant 0 : i32
    return %arg0, %c0_i32 : i32, i32
  }
  func.func @transform_1(%arg0: i32) -> (i32, i32) {
    %c0_i32 = arith.constant 0 : i32
    %c0_i32_0 = arith.constant 0 : i32
    %c0_i32_1 = arith.constant 0 : i32
    return %c0_i32, %c0_i32_0 : i32, i32
  }
  func.func @transform_2(%arg0: i32) -> (i32, i32) {
    %c0_i32 = arith.constant 0 : i32
    %c0_i32_0 = arith.constant 0 : i32
    %c0_i32_1 = arith.constant 0 : i32
    return %c0_i32, %c0_i32_0 : i32, i32
  }
  func.func @transform_3(%arg0: i32) -> (i32, i32) {
    %c0_i32 = arith.constant 0 : i32
    %c0_i32_0 = arith.constant 0 : i32
    %c0_i32_1 = arith.constant 0 : i32
    return %c0_i32, %c0_i32_0 : i32, i32
  }
  func.func @transform_4(%arg0: i32) -> (i32, i32) {
    %c0_i32 = arith.constant 0 : i32
    %c0_i32_0 = arith.constant 0 : i32
    %c0_i32_1 = arith.constant 0 : i32
    return %c0_i32, %c0_i32_0 : i32, i32
  }
  func.func @transform_5(%arg0: i32) -> (i32, i32) {
    %c0_i32 = arith.constant 0 : i32
    %c0_i32_0 = arith.constant 0 : i32
    return %arg0, %c0_i32 : i32, i32
  }
}

</mosaic_0001>

<llo_original>
// kernel: tpu_custom_call.1
$region0: #{tpu_custom_call.1}
  #allocation0 [shape = 'u32[]', space=smem, size = 0x4, offset = 0x4, fixed_abs, tag = 'smem constant byte address 0x4 - core index']
  #allocation1 [shape = 'u32[144,128]{1,0:T(1,128)}', space=vmem, size = 0x12000, scoped, tag = 'internal scratch']
  %s0 = inlined_call_operand.hbm [shape: bf16[8,1024], index: 0, kind: input, shape index: {}]
  %s1 = inlined_call_operand.hbm [shape: bf16[1024,256], index: 1, kind: input, shape index: {}]
  %s2 = inlined_call_operand.vmem [shape: f32[1,256], index: 2, kind: input, shape index: {}]
  %s3 = inlined_call_operand.hbm [shape: bf16[256,1024], index: 3, kind: input, shape index: {}]
  %s4 = inlined_call_operand.vmem [shape: f32[1,1024], index: 4, kind: input, shape index: {}]
  %s5 = inlined_call_operand.hbm [shape: f32[8,1024], index: 5, kind: output, shape index: {}]
  %s6 = sld [smem:[#allocation0]]
  $region42: #{tpu_custom_call.1} parent=0
    _
  %s8 = ssub.s32 1, %s6
  %s9 = scalar_select 0, %s8, %s6
  $region1: #{tpu_custom_call.1} parent=0
    #allocation2 [shape = 'u8[16384]{0}', space=vmem, size = 0x4000, scoped, tag = 'input window, operand 0, single buffered']
    #allocation3 [shape = 's32[1]{0}', space=sflag, size = 0x4, scoped, tag = 'scoped memory for tpu_custom_call.1']
    #allocation4 [shape = 's32[1]{0}', space=sflag, size = 0x4, scoped, tag = 'scoped memory for tpu_custom_call.1']
    #allocation5 [shape = 'u8[524288]{0}', space=vmem, size = 0x80000, scoped, tag = 'input window, operand 1, single buffered']
    #allocation6 [shape = 's32[1]{0}', space=sflag, size = 0x4, scoped, tag = 'scoped memory for tpu_custom_call.1']
    #allocation7 [shape = 'u8[524288]{0}', space=vmem, size = 0x80000, scoped, tag = 'input window, operand 3, single buffered']
    #allocation8 [shape = 'u8[32768]{0}', space=vmem, size = 0x8000, scoped, tag = 'output window, operand 0, single buffered']
    %10 = vsyncpa [#allocation3], 0
    %11 = vsyncpa [#allocation6], 0
    %12 = vsyncpa [#allocation4], 0
    // Predicated region
    $region2: #{tpu_custom_call.1} parent=1 // pred_check
      _
    $region3: #{tpu_custom_call.1} parent=1 // pred_check_branch
      %14 = sbr.rel (0) target = $region5
    $region4: #{tpu_custom_call.1} parent=1 // pred_region
      %s16 = ssub.s32 512, 512
      %17 = vsyncadd [#allocation3], %s16
      %s19 = sshll.u32 [#allocation2], 4
      %s20 = int_to_ptr.vmem [resolvable:$true] %s19
      %22 = dma.hbm_to_vmem [thread:$0]  %s0, 512, %s20, [#allocation3]
    $region5: #{tpu_custom_call.1} parent=1 // pred_fallthru
      _
    // Predicated region
    $region6: #{tpu_custom_call.1} parent=1 // pred_check
      _
    $region7: #{tpu_custom_call.1} parent=1 // pred_check_branch
      %24 = sbr.rel (0) target = $region9
    $region8: #{tpu_custom_call.1} parent=1 // pred_region
      %s26 = ssub.s32 16384, 16384
      %27 = vsyncadd [#allocation6], %s26
      %s28 = sshll.u32 [#allocation5], 4
      %s29 = int_to_ptr.vmem [resolvable:$true] %s28
      %34 = dma.hbm_to_vmem [thread:$0]  %s1, 16384, %s29, [#allocation6], 128, 128, 8
    $region9: #{tpu_custom_call.1} parent=1 // pred_fallthru
      _
    // Predicated region
    $region10: #{tpu_custom_call.1} parent=1 // pred_check
      _
    $region11: #{tpu_custom_call.1} parent=1 // pred_check_branch
      %36 = sbr.rel (0) target = $region13
    $region12: #{tpu_custom_call.1} parent=1 // pred_region
      _
    $region13: #{tpu_custom_call.1} parent=1 // pred_fallthru
      _
    // Predicated region
    $region14: #{tpu_custom_call.1} parent=1 // pred_check
      _
    $region15: #{tpu_custom_call.1} parent=1 // pred_check_branch
      %38 = sbr.rel (0) target = $region17
    $region16: #{tpu_custom_call.1} parent=1 // pred_region
      %s40 = ssub.s32 16384, 16384
      %41 = vsyncadd [#allocation6], %s40
      %s42 = sshll.u32 [#allocation7], 4
      %s43 = int_to_ptr.vmem [resolvable:$true] %s42
      %48 = dma.hbm_to_vmem [thread:$0]  %s3, 16384, %s43, [#allocation6], 512, 512, 32
    $region17: #{tpu_custom_call.1} parent=1 // pred_fallthru
      _
    // Predicated region
    $region18: #{tpu_custom_call.1} parent=1 // pred_check
      _
    $region19: #{tpu_custom_call.1} parent=1 // pred_check_branch
      %50 = sbr.rel (0) target = $region21
    $region20: #{tpu_custom_call.1} parent=1 // pred_region
      _
    $region21: #{tpu_custom_call.1} parent=1 // pred_fallthru
      _
    // Predicated region
    $region22: #{tpu_custom_call.1} parent=1 // pred_check
      _
    $region23: #{tpu_custom_call.1} parent=1 // pred_check_branch
      %52 = sbr.rel (0) target = $region25
    $region24: #{tpu_custom_call.1} parent=1 // pred_region
      %53 = dma.done [#allocation3], 512
    $region25: #{tpu_custom_call.1} parent=1 // pred_fallthru
      _
    // Predicated region
    $region26: #{tpu_custom_call.1} parent=1 // pred_check
      _
    $region27: #{tpu_custom_call.1} parent=1 // pred_check_branch
      %55 = sbr.rel (0) target = $region29
    $region28: #{tpu_custom_call.1} parent=1 // pred_region
      %56 = dma.done [#allocation6], 16384
    $region29: #{tpu_custom_call.1} parent=1 // pred_fallthru
      _
    // Predicated region
    $region30: #{tpu_custom_call.1} parent=1 // pred_check
      _
    $region31: #{tpu_custom_call.1} parent=1 // pred_check_branch
      %58 = sbr.rel (0) target = $region33
    $region32: #{tpu_custom_call.1} parent=1 // pred_region
      %59 = dma.done [#allocation6], 16384
    $region33: #{tpu_custom_call.1} parent=1 // pred_fallthru
      _
    %v60 = vld [vmem:[#allocation2] sm:$0xff]
    %v61 = vld [vmem:[#allocation2 + $0x8] sm:$0xff]
    %v62 = vld [vmem:[#allocation2 + $0x10] sm:$0xff]
    %v63 = vld [vmem:[#allocation2 + $0x18] sm:$0xff]
    %v64 = vld [vmem:[#allocation5] sm:$0xff]
    %v65 = vld [vmem:[#allocation5 + $0x8] sm:$0xff]
    %v66 = vld [vmem:[#allocation5 + $0x10] sm:$0xff]
    %v67 = vld [vmem:[#allocation5 + $0x18] sm:$0xff]
    %v68 = vld [vmem:[#allocation5 + $0x20] sm:$0xff]
    %v69 = vld [vmem:[#allocation5 + $0x28] sm:$0xff]
    %v70 = vld [vmem:[#allocation5 + $0x30] sm:$0xff]
    %v71 = vld [vmem:[#allocation5 + $0x38] sm:$0xff]
    %v72 = vld [vmem:[#allocation5 + $0x40] sm:$0xff]
    %v73 = vld [vmem:[#allocation5 + $0x48] sm:$0xff]
    %v74 = vld [vmem:[#allocation5 + $0x50] sm:$0xff]
    %v75 = vld [vmem:[#allocation5 + $0x58] sm:$0xff]
    %v76 = vld [vmem:[#allocation5 + $0x60] sm:$0xff]
    %v77 = vld [vmem:[#allocation5 + $0x68] sm:$0xff]
    %v78 = vld [vmem:[#allocation5 + $0x70] sm:$0xff]
    %v79 = vld [vmem:[#allocation5 + $0x78] sm:$0xff]
    %v80 = vld [vmem:[#allocation5 + $0x80] sm:$0xff]
    %v81 = vld [vmem:[#allocation5 + $0x88] sm:$0xff]
    %v82 = vld [vmem:[#allocation5 + $0x90] sm:$0xff]
    %v83 = vld [vmem:[#allocation5 + $0x98] sm:$0xff]
    %v84 = vld [vmem:[#allocation5 + $0xa0] sm:$0xff]
    %v85 = vld [vmem:[#allocation5 + $0xa8] sm:$0xff]
    %v86 = vld [vmem:[#allocation5 + $0xb0] sm:$0xff]
    %v87 = vld [vmem:[#allocation5 + $0xb8] sm:$0xff]
    %v88 = vld [vmem:[#allocation5 + $0xc0] sm:$0xff]
    %v89 = vld [vmem:[#allocation5 + $0xc8] sm:$0xff]
    %v90 = vld [vmem:[#allocation5 + $0xd0] sm:$0xff]
    %v91 = vld [vmem:[#allocation5 + $0xd8] sm:$0xff]
    %v92 = vld [vmem:[#allocation5 + $0xe0] sm:$0xff]
    %v93 = vld [vmem:[#allocation5 + $0xe8] sm:$0xff]
    %v94 = vld [vmem:[#allocation5 + $0xf0] sm:$0xff]
    %v95 = vld [vmem:[#allocation5 + $0xf8] sm:$0xff]
    %v96 = vld [vmem:[#allocation5 + $0x100] sm:$0xff]
    %v97 = vld [vmem:[#allocation5 + $0x108] sm:$0xff]
    %v98 = vld [vmem:[#allocation5 + $0x110] sm:$0xff]
    %v99 = vld [vmem:[#allocation5 + $0x118] sm:$0xff]
    %v100 = vld [vmem:[#allocation5 + $0x120] sm:$0xff]
    %v101 = vld [vmem:[#allocation5 + $0x128] sm:$0xff]
    %v102 = vld [vmem:[#allocation5 + $0x130] sm:$0xff]
    %v103 = vld [vmem:[#allocation5 + $0x138] sm:$0xff]
    %v104 = vld [vmem:[#allocation5 + $0x140] sm:$0xff]
    %v105 = vld [vmem:[#allocation5 + $0x148] sm:$0xff]
    %v106 = vld [vmem:[#allocation5 + $0x150] sm:$0xff]
    %v107 = vld [vmem:[#allocation5 + $0x158] sm:$0xff]
    %v108 = vld [vmem:[#allocation5 + $0x160] sm:$0xff]
    %v109 = vld [vmem:[#allocation5 + $0x168] sm:$0xff]
    %v110 = vld [vmem:[#allocation5 + $0x170] sm:$0xff]
    %v111 = vld [vmem:[#allocation5 + $0x178] sm:$0xff]
    %v112 = vld [vmem:[#allocation5 + $0x180] sm:$0xff]
    %v113 = vld [vmem:[#allocation5 + $0x188] sm:$0xff]
    %v114 = vld [vmem:[#allocation5 + $0x190] sm:$0xff]
    %v115 = vld [vmem:[#allocation5 + $0x198] sm:$0xff]
    %v116 = vld [vmem:[#allocation5 + $0x1a0] sm:$0xff]
    %v117 = vld [vmem:[#allocation5 + $0x1a8] sm:$0xff]
    %v118 = vld [vmem:[#allocation5 + $0x1b0] sm:$0xff]
    %v119 = vld [vmem:[#allocation5 + $0x1b8] sm:$0xff]
    %v120 = vld [vmem:[#allocation5 + $0x1c0] sm:$0xff]
    %v121 = vld [vmem:[#allocation5 + $0x1c8] sm:$0xff]
    %v122 = vld [vmem:[#allocation5 + $0x1d0] sm:$0xff]
    %v123 = vld [vmem:[#allocation5 + $0x1d8] sm:$0xff]
    %v124 = vld [vmem:[#allocation5 + $0x1e0] sm:$0xff]
    %v125 = vld [vmem:[#allocation5 + $0x1e8] sm:$0xff]
    %v126 = vld [vmem:[#allocation5 + $0x1f0] sm:$0xff]
    %v127 = vld [vmem:[#allocation5 + $0x1f8] sm:$0xff]
    %v128 = vld [vmem:[#allocation5 + $0x200] sm:$0xff]
    %v129 = vld [vmem:[#allocation5 + $0x208] sm:$0xff]
    %v130 = vld [vmem:[#allocation5 + $0x210] sm:$0xff]
    %v131 = vld [vmem:[#allocation5 + $0x218] sm:$0xff]
    %v132 = vld [vmem:[#allocation5 + $0x220] sm:$0xff]
    %v133 = vld [vmem:[#allocation5 + $0x228] sm:$0xff]
    %v134 = vld [vmem:[#allocation5 + $0x230] sm:$0xff]
    %v135 = vld [vmem:[#allocation5 + $0x238] sm:$0xff]
    %v136 = vld [vmem:[#allocation5 + $0x240] sm:$0xff]
    %v137 = vld [vmem:[#allocation5 + $0x248] sm:$0xff]
    %v138 = vld [vmem:[#allocation5 + $0x250] sm:$0xff]
    %v139 = vld [vmem:[#allocation5 + $0x258] sm:$0xff]
    %v140 = vld [vmem:[#allocation5 + $0x260] sm:$0xff]
    %v141 = vld [vmem:[#allocation5 + $0x268] sm:$0xff]
    %v142 = vld [vmem:[#allocation5 + $0x270] sm:$0xff]
    %v143 = vld [vmem:[#allocation5 + $0x278] sm:$0xff]
    %v144 = vld [vmem:[#allocation5 + $0x280] sm:$0xff]
    %v145 = vld [vmem:[#allocation5 + $0x288] sm:$0xff]
    %v146 = vld [vmem:[#allocation5 + $0x290] sm:$0xff]
    %v147 = vld [vmem:[#allocation5 + $0x298] sm:$0xff]
    %v148 = vld [vmem:[#allocation5 + $0x2a0] sm:$0xff]
    %v149 = vld [vmem:[#allocation5 + $0x2a8] sm:$0xff]
    %v150 = vld [vmem:[#allocation5 + $0x2b0] sm:$0xff]
    %v151 = vld [vmem:[#allocation5 + $0x2b8] sm:$0xff]
    %v152 = vld [vmem:[#allocation5 + $0x2c0] sm:$0xff]
    %v153 = vld [vmem:[#allocation5 + $0x2c8] sm:$0xff]
    %v154 = vld [vmem:[#allocation5 + $0x2d0] sm:$0xff]
    %v155 = vld [vmem:[#allocation5 + $0x2d8] sm:$0xff]
    %v156 = vld [vmem:[#allocation5 + $0x2e0] sm:$0xff]
    %v157 = vld [vmem:[#allocation5 + $0x2e8] sm:$0xff]
    %v158 = vld [vmem:[#allocation5 + $0x2f0] sm:$0xff]
    %v159 = vld [vmem:[#allocation5 + $0x2f8] sm:$0xff]
    %v160 = vld [vmem:[#allocation5 + $0x300] sm:$0xff]
    %v161 = vld [vmem:[#allocation5 + $0x308] sm:$0xff]
    %v162 = vld [vmem:[#allocation5 + $0x310] sm:$0xff]
    %v163 = vld [vmem:[#allocation5 + $0x318] sm:$0xff]
    %v164 = vld [vmem:[#allocation5 + $0x320] sm:$0xff]
    %v165 = vld [vmem:[#allocation5 + $0x328] sm:$0xff]
    %v166 = vld [vmem:[#allocation5 + $0x330] sm:$0xff]
    %v167 = vld [vmem:[#allocation5 + $0x338] sm:$0xff]
    %v168 = vld [vmem:[#allocation5 + $0x340] sm:$0xff]
    %v169 = vld [vmem:[#allocation5 + $0x348] sm:$0xff]
    %v170 = vld [vmem:[#allocation5 + $0x350] sm:$0xff]
    %v171 = vld [vmem:[#allocation5 + $0x358] sm:$0xff]
    %v172 = vld [vmem:[#allocation5 + $0x360] sm:$0xff]
    %v173 = vld [vmem:[#allocation5 + $0x368] sm:$0xff]
    %v174 = vld [vmem:[#allocation5 + $0x370] sm:$0xff]
    %v175 = vld [vmem:[#allocation5 + $0x378] sm:$0xff]
    %v176 = vld [vmem:[#allocation5 + $0x380] sm:$0xff]
    %v177 = vld [vmem:[#allocation5 + $0x388] sm:$0xff]
    %v178 = vld [vmem:[#allocation5 + $0x390] sm:$0xff]
    %v179 = vld [vmem:[#allocation5 + $0x398] sm:$0xff]
    %v180 = vld [vmem:[#allocation5 + $0x3a0] sm:$0xff]
    %v181 = vld [vmem:[#allocation5 + $0x3a8] sm:$0xff]
    %v182 = vld [vmem:[#allocation5 + $0x3b0] sm:$0xff]
    %v183 = vld [vmem:[#allocation5 + $0x3b8] sm:$0xff]
    %v184 = vld [vmem:[#allocation5 + $0x3c0] sm:$0xff]
    %v185 = vld [vmem:[#allocation5 + $0x3c8] sm:$0xff]
    %v186 = vld [vmem:[#allocation5 + $0x3d0] sm:$0xff]
    %v187 = vld [vmem:[#allocation5 + $0x3d8] sm:$0xff]
    %v188 = vld [vmem:[#allocation5 + $0x3e0] sm:$0xff]
    %v189 = vld [vmem:[#allocation5 + $0x3e8] sm:$0xff]
    %v190 = vld [vmem:[#allocation5 + $0x3f0] sm:$0xff]
    %v191 = vld [vmem:[#allocation5 + $0x3f8] sm:$0xff]
    %v192 = vld [vmem:[%s2] sm:$0x3]
    %v194 = vlaneseq
    %v195 = vshrl.u32 %v194, 7
    %v196 = vsub.s32 0, %v195
    %v197 = vrot.slane %v192, %v196
    %v198 = vlaneseq
    %v199 = vshrl.u32 %v198, 7
    %v200 = vsub.s32 1, %v199
    %v201 = vrot.slane %v192, %v200
    %v208 = vunpack.c.l.b16 %v60
    %v209 = vunpack.c.h.b16 %v60
    %v210 = vunpack.c.l.b16 %v61
    %v211 = vunpack.c.h.b16 %v61
    %v212 = vunpack.c.l.b16 %v62
    %v213 = vunpack.c.h.b16 %v62
    %v214 = vunpack.c.l.b16 %v63
    %v215 = vunpack.c.h.b16 %v63
    %v216 = vpack.c.b16 %v208, %v208
    %v217 = vpack.c.b16 %v209, %v209
    %v218 = vpack.c.b16 %v210, %v210
    %v219 = vpack.c.b16 %v211, %v211
    %v220 = vpack.c.b16 %v212, %v212
    %v221 = vpack.c.b16 %v213, %v213
    %v222 = vpack.c.b16 %v214, %v214
    %v223 = vpack.c.b16 %v215, %v215
    %v360 = vunpack.c.l.b16 %v64
    %v361 = vunpack.c.h.b16 %v64
    %v362 = vunpack.c.l.b16 %v65
    %v363 = vunpack.c.h.b16 %v65
    %v364 = vunpack.c.l.b16 %v66
    %v365 = vunpack.c.h.b16 %v66
    %v366 = vunpack.c.l.b16 %v67
    %v367 = vunpack.c.h.b16 %v67
    %v368 = vunpack.c.l.b16 %v68
    %v369 = vunpack.c.h.b16 %v68
    %v370 = vunpack.c.l.b16 %v69
    %v371 = vunpack.c.h.b16 %v69
    %v372 = vunpack.c.l.b16 %v70
    %v373 = vunpack.c.h.b16 %v70
    %v374 = vunpack.c.l.b16 %v71
    %v375 = vunpack.c.h.b16 %v71
    %v376 = vunpack.c.l.b16 %v72
    %v377 = vunpack.c.h.b16 %v72
    %v378 = vunpack.c.l.b16 %v73
    %v379 = vunpack.c.h.b16 %v73
    %v380 = vunpack.c.l.b16 %v74
    %v381 = vunpack.c.h.b16 %v74
    %v382 = vunpack.c.l.b16 %v75
    %v383 = vunpack.c.h.b16 %v75
    %v384 = vunpack.c.l.b16 %v76
    %v385 = vunpack.c.h.b16 %v76
    %v386 = vunpack.c.l.b16 %v77
    %v387 = vunpack.c.h.b16 %v77
    %v388 = vunpack.c.l.b16 %v78
    %v389 = vunpack.c.h.b16 %v78
    %v390 = vunpack.c.l.b16 %v79
    %v391 = vunpack.c.h.b16 %v79
    %v392 = vunpack.c.l.b16 %v80
    %v393 = vunpack.c.h.b16 %v80
    %v394 = vunpack.c.l.b16 %v81
    %v395 = vunpack.c.h.b16 %v81
    %v396 = vunpack.c.l.b16 %v82
    %v397 = vunpack.c.h.b16 %v82
    %v398 = vunpack.c.l.b16 %v83
    %v399 = vunpack.c.h.b16 %v83
    %v400 = vunpack.c.l.b16 %v84
    %v401 = vunpack.c.h.b16 %v84
    %v402 = vunpack.c.l.b16 %v85
    %v403 = vunpack.c.h.b16 %v85
    %v404 = vunpack.c.l.b16 %v86
    %v405 = vunpack.c.h.b16 %v86
    %v406 = vunpack.c.l.b16 %v87
    %v407 = vunpack.c.h.b16 %v87
    %v408 = vunpack.c.l.b16 %v88
    %v409 = vunpack.c.h.b16 %v88
    %v410 = vunpack.c.l.b16 %v89
    %v411 = vunpack.c.h.b16 %v89
    %v412 = vunpack.c.l.b16 %v90
    %v413 = vunpack.c.h.b16 %v90
    %v414 = vunpack.c.l.b16 %v91
    %v415 = vunpack.c.h.b16 %v91
    %v416 = vunpack.c.l.b16 %v92
    %v417 = vunpack.c.h.b16 %v92
    %v418 = vunpack.c.l.b16 %v93
    %v419 = vunpack.c.h.b16 %v93
    %v420 = vunpack.c.l.b16 %v94
    %v421 = vunpack.c.h.b16 %v94
    %v422 = vunpack.c.l.b16 %v95
    %v423 = vunpack.c.h.b16 %v95
    %v424 = vunpack.c.l.b16 %v96
    %v425 = vunpack.c.h.b16 %v96
    %v426 = vunpack.c.l.b16 %v97
    %v427 = vunpack.c.h.b16 %v97
    %v428 = vunpack.c.l.b16 %v98
    %v429 = vunpack.c.h.b16 %v98
    %v430 = vunpack.c.l.b16 %v99
    %v431 = vunpack.c.h.b16 %v99
    %v432 = vunpack.c.l.b16 %v100
    %v433 = vunpack.c.h.b16 %v100
    %v434 = vunpack.c.l.b16 %v101
    %v435 = vunpack.c.h.b16 %v101
    %v436 = vunpack.c.l.b16 %v102
    %v437 = vunpack.c.h.b16 %v102
    %v438 = vunpack.c.l.b16 %v103
    %v439 = vunpack.c.h.b16 %v103
    %v440 = vunpack.c.l.b16 %v104
    %v441 = vunpack.c.h.b16 %v104
    %v442 = vunpack.c.l.b16 %v105
    %v443 = vunpack.c.h.b16 %v105
    %v444 = vunpack.c.l.b16 %v106
    %v445 = vunpack.c.h.b16 %v106
    %v446 = vunpack.c.l.b16 %v107
    %v447 = vunpack.c.h.b16 %v107
    %v448 = vunpack.c.l.b16 %v108
    %v449 = vunpack.c.h.b16 %v108
    %v450 = vunpack.c.l.b16 %v109
    %v451 = vunpack.c.h.b16 %v109
    %v452 = vunpack.c.l.b16 %v110
    %v453 = vunpack.c.h.b16 %v110
    %v454 = vunpack.c.l.b16 %v111
    %v455 = vunpack.c.h.b16 %v111
    %v456 = vunpack.c.l.b16 %v112
    %v457 = vunpack.c.h.b16 %v112
    %v458 = vunpack.c.l.b16 %v113
    %v459 = vunpack.c.h.b16 %v113
    %v460 = vunpack.c.l.b16 %v114
    %v461 = vunpack.c.h.b16 %v114
    %v462 = vunpack.c.l.b16 %v115
    %v463 = vunpack.c.h.b16 %v115
    %v464 = vunpack.c.l.b16 %v116
    %v465 = vunpack.c.h.b16 %v116
    %v466 = vunpack.c.l.b16 %v117
    %v467 = vunpack.c.h.b16 %v117
    %v468 = vunpack.c.l.b16 %v118
    %v469 = vunpack.c.h.b16 %v118
    %v470 = vunpack.c.l.b16 %v119
    %v471 = vunpack.c.h.b16 %v119
    %v472 = vunpack.c.l.b16 %v120
    %v473 = vunpack.c.h.b16 %v120
    %v474 = vunpack.c.l.b16 %v121
    %v475 = vunpack.c.h.b16 %v121
    %v476 = vunpack.c.l.b16 %v122
    %v477 = vunpack.c.h.b16 %v122
    %v478 = vunpack.c.l.b16 %v123
    %v479 = vunpack.c.h.b16 %v123
    %v480 = vunpack.c.l.b16 %v124
    %v481 = vunpack.c.h.b16 %v124
    %v482 = vunpack.c.l.b16 %v125
    %v483 = vunpack.c.h.b16 %v125
    %v484 = vunpack.c.l.b16 %v126
    %v485 = vunpack.c.h.b16 %v126
    %v486 = vunpack.c.l.b16 %v127
    %v487 = vunpack.c.h.b16 %v127
    %v488 = vunpack.c.l.b16 %v128
    %v489 = vunpack.c.h.b16 %v128
    %v490 = vunpack.c.l.b16 %v129
    %v491 = vunpack.c.h.b16 %v129
    %v492 = vunpack.c.l.b16 %v130
    %v493 = vunpack.c.h.b16 %v130
    %v494 = vunpack.c.l.b16 %v131
    %v495 = vunpack.c.h.b16 %v131
    %v496 = vunpack.c.l.b16 %v132
    %v497 = vunpack.c.h.b16 %v132
    %v498 = vunpack.c.l.b16 %v133
    %v499 = vunpack.c.h.b16 %v133
    %v500 = vunpack.c.l.b16 %v134
    %v501 = vunpack.c.h.b16 %v134
    %v502 = vunpack.c.l.b16 %v135
    %v503 = vunpack.c.h.b16 %v135
    %v504 = vunpack.c.l.b16 %v136
    %v505 = vunpack.c.h.b16 %v136
    %v506 = vunpack.c.l.b16 %v137
    %v507 = vunpack.c.h.b16 %v137
    %v508 = vunpack.c.l.b16 %v138
    %v509 = vunpack.c.h.b16 %v138
    %v510 = vunpack.c.l.b16 %v139
    %v511 = vunpack.c.h.b16 %v139
    %v512 = vunpack.c.l.b16 %v140
    %v513 = vunpack.c.h.b16 %v140
    %v514 = vunpack.c.l.b16 %v141
    %v515 = vunpack.c.h.b16 %v141
    %v516 = vunpack.c.l.b16 %v142
    %v517 = vunpack.c.h.b16 %v142
    %v518 = vunpack.c.l.b16 %v143
    %v519 = vunpack.c.h.b16 %v143
    %v520 = vunpack.c.l.b16 %v144
    %v521 = vunpack.c.h.b16 %v144
    %v522 = vunpack.c.l.b16 %v145
    %v523 = vunpack.c.h.b16 %v145
    %v524 = vunpack.c.l.b16 %v146
    %v525 = vunpack.c.h.b16 %v146
    %v526 = vunpack.c.l.b16 %v147
    %v527 = vunpack.c.h.b16 %v147
    %v528 = vunpack.c.l.b16 %v148
    %v529 = vunpack.c.h.b16 %v148
    %v530 = vunpack.c.l.b16 %v149
    %v531 = vunpack.c.h.b16 %v149
    %v532 = vunpack.c.l.b16 %v150
    %v533 = vunpack.c.h.b16 %v150
    %v534 = vunpack.c.l.b16 %v151
    %v535 = vunpack.c.h.b16 %v151
    %v536 = vunpack.c.l.b16 %v152
    %v537 = vunpack.c.h.b16 %v152
    %v538 = vunpack.c.l.b16 %v153
    %v539 = vunpack.c.h.b16 %v153
    %v540 = vunpack.c.l.b16 %v154
    %v541 = vunpack.c.h.b16 %v154
    %v542 = vunpack.c.l.b16 %v155
    %v543 = vunpack.c.h.b16 %v155
    %v544 = vunpack.c.l.b16 %v156
    %v545 = vunpack.c.h.b16 %v156
    %v546 = vunpack.c.l.b16 %v157
    %v547 = vunpack.c.h.b16 %v157
    %v548 = vunpack.c.l.b16 %v158
    %v549 = vunpack.c.h.b16 %v158
    %v550 = vunpack.c.l.b16 %v159
    %v551 = vunpack.c.h.b16 %v159
    %v552 = vunpack.c.l.b16 %v160
    %v553 = vunpack.c.h.b16 %v160
    %v554 = vunpack.c.l.b16 %v161
    %v555 = vunpack.c.h.b16 %v161
    %v556 = vunpack.c.l.b16 %v162
    %v557 = vunpack.c.h.b16 %v162
    %v558 = vunpack.c.l.b16 %v163
    %v559 = vunpack.c.h.b16 %v163
    %v560 = vunpack.c.l.b16 %v164
    %v561 = vunpack.c.h.b16 %v164
    %v562 = vunpack.c.l.b16 %v165
    %v563 = vunpack.c.h.b16 %v165
    %v564 = vunpack.c.l.b16 %v166
    %v565 = vunpack.c.h.b16 %v166
    %v566 = vunpack.c.l.b16 %v167
    %v567 = vunpack.c.h.b16 %v167
    %v568 = vunpack.c.l.b16 %v168
    %v569 = vunpack.c.h.b16 %v168
    %v570 = vunpack.c.l.b16 %v169
    %v571 = vunpack.c.h.b16 %v169
    %v572 = vunpack.c.l.b16 %v170
    %v573 = vunpack.c.h.b16 %v170
    %v574 = vunpack.c.l.b16 %v171
    %v575 = vunpack.c.h.b16 %v171
    %v576 = vunpack.c.l.b16 %v172
    %v577 = vunpack.c.h.b16 %v172
    %v578 = vunpack.c.l.b16 %v173
    %v579 = vunpack.c.h.b16 %v173
    %v580 = vunpack.c.l.b16 %v174
    %v581 = vunpack.c.h.b16 %v174
    %v582 = vunpack.c.l.b16 %v175
    %v583 = vunpack.c.h.b16 %v175
    %v584 = vunpack.c.l.b16 %v176
    %v585 = vunpack.c.h.b16 %v176
    %v586 = vunpack.c.l.b16 %v177
    %v587 = vunpack.c.h.b16 %v177
    %v588 = vunpack.c.l.b16 %v178
    %v589 = vunpack.c.h.b16 %v178
    %v590 = vunpack.c.l.b16 %v179
    %v591 = vunpack.c.h.b16 %v179
    %v592 = vunpack.c.l.b16 %v180
    %v593 = vunpack.c.h.b16 %v180
    %v594 = vunpack.c.l.b16 %v181
    %v595 = vunpack.c.h.b16 %v181
    %v596 = vunpack.c.l.b16 %v182
    %v597 = vunpack.c.h.b16 %v182
    %v598 = vunpack.c.l.b16 %v183
    %v599 = vunpack.c.h.b16 %v183
    %v600 = vunpack.c.l.b16 %v184
    %v601 = vunpack.c.h.b16 %v184
    %v602 = vunpack.c.l.b16 %v185
    %v603 = vunpack.c.h.b16 %v185
    %v604 = vunpack.c.l.b16 %v186
    %v605 = vunpack.c.h.b16 %v186
    %v606 = vunpack.c.l.b16 %v187
    %v607 = vunpack.c.h.b16 %v187
    %v608 = vunpack.c.l.b16 %v188
    %v609 = vunpack.c.h.b16 %v188
    %v610 = vunpack.c.l.b16 %v189
    %v611 = vunpack.c.h.b16 %v189
    %v612 = vunpack.c.l.b16 %v190
    %v613 = vunpack.c.h.b16 %v190
    %v614 = vunpack.c.l.b16 %v191
    %v615 = vunpack.c.h.b16 %v191
    %v616 = vpack.c.b16 %v362, %v360
    %v617 = vpack.c.b16 %v363, %v361
    %v618 = vpack.c.b16 %v366, %v364
    %v619 = vpack.c.b16 %v367, %v365
    %v620 = vpack.c.b16 %v370, %v368
    %v621 = vpack.c.b16 %v371, %v369
    %v622 = vpack.c.b16 %v374, %v372
    %v623 = vpack.c.b16 %v375, %v373
    %v624 = vpack.c.b16 %v378, %v376
    %v625 = vpack.c.b16 %v379, %v377
    %v626 = vpack.c.b16 %v382, %v380
    %v627 = vpack.c.b16 %v383, %v381
    %v628 = vpack.c.b16 %v386, %v384
    %v629 = vpack.c.b16 %v387, %v385
    %v630 = vpack.c.b16 %v390, %v388
    %v631 = vpack.c.b16 %v391, %v389
    %v632 = vpack.c.b16 %v394, %v392
    %v633 = vpack.c.b16 %v395, %v393
    %v634 = vpack.c.b16 %v398, %v396
    %v635 = vpack.c.b16 %v399, %v397
    %v636 = vpack.c.b16 %v402, %v400
    %v637 = vpack.c.b16 %v403, %v401
    %v638 = vpack.c.b16 %v406, %v404
    %v639 = vpack.c.b16 %v407, %v405
    %v640 = vpack.c.b16 %v410, %v408
    %v641 = vpack.c.b16 %v411, %v409
    %v642 = vpack.c.b16 %v414, %v412
    %v643 = vpack.c.b16 %v415, %v413
    %v644 = vpack.c.b16 %v418, %v416
    %v645 = vpack.c.b16 %v419, %v417
    %v646 = vpack.c.b16 %v422, %v420
    %v647 = vpack.c.b16 %v423, %v421
    %v648 = vpack.c.b16 %v426, %v424
    %v649 = vpack.c.b16 %v427, %v425
    %v650 = vpack.c.b16 %v430, %v428
    %v651 = vpack.c.b16 %v431, %v429
    %v652 = vpack.c.b16 %v434, %v432
    %v653 = vpack.c.b16 %v435, %v433
    %v654 = vpack.c.b16 %v438, %v436
    %v655 = vpack.c.b16 %v439, %v437
    %v656 = vpack.c.b16 %v442, %v440
    %v657 = vpack.c.b16 %v443, %v441
    %v658 = vpack.c.b16 %v446, %v444
    %v659 = vpack.c.b16 %v447, %v445
    %v660 = vpack.c.b16 %v450, %v448
    %v661 = vpack.c.b16 %v451, %v449
    %v662 = vpack.c.b16 %v454, %v452
    %v663 = vpack.c.b16 %v455, %v453
    %v664 = vpack.c.b16 %v458, %v456
    %v665 = vpack.c.b16 %v459, %v457
    %v666 = vpack.c.b16 %v462, %v460
    %v667 = vpack.c.b16 %v463, %v461
    %v668 = vpack.c.b16 %v466, %v464
    %v669 = vpack.c.b16 %v467, %v465
    %v670 = vpack.c.b16 %v470, %v468
    %v671 = vpack.c.b16 %v471, %v469
    %v672 = vpack.c.b16 %v474, %v472
    %v673 = vpack.c.b16 %v475, %v473
    %v674 = vpack.c.b16 %v478, %v476
    %v675 = vpack.c.b16 %v479, %v477
    %v676 = vpack.c.b16 %v482, %v480
    %v677 = vpack.c.b16 %v483, %v481
    %v678 = vpack.c.b16 %v486, %v484
    %v679 = vpack.c.b16 %v487, %v485
    %v680 = vpack.c.b16 %v490, %v488
    %v681 = vpack.c.b16 %v491, %v489
    %v682 = vpack.c.b16 %v494, %v492
    %v683 = vpack.c.b16 %v495, %v493
    %v684 = vpack.c.b16 %v498, %v496
    %v685 = vpack.c.b16 %v499, %v497
    %v686 = vpack.c.b16 %v502, %v500
    %v687 = vpack.c.b16 %v503, %v501
    %v688 = vpack.c.b16 %v506, %v504
    %v689 = vpack.c.b16 %v507, %v505
    %v690 = vpack.c.b16 %v510, %v508
    %v691 = vpack.c.b16 %v511, %v509
    %v692 = vpack.c.b16 %v514, %v512
    %v693 = vpack.c.b16 %v515, %v513
    %v694 = vpack.c.b16 %v518, %v516
    %v695 = vpack.c.b16 %v519, %v517
    %v696 = vpack.c.b16 %v522, %v520
    %v697 = vpack.c.b16 %v523, %v521
    %v698 = vpack.c.b16 %v526, %v524
    %v699 = vpack.c.b16 %v527, %v525
    %v700 = vpack.c.b16 %v530, %v528
    %v701 = vpack.c.b16 %v531, %v529
    %v702 = vpack.c.b16 %v534, %v532
    %v703 = vpack.c.b16 %v535, %v533
    %v704 = vpack.c.b16 %v538, %v536
    %v705 = vpack.c.b16 %v539, %v537
    %v706 = vpack.c.b16 %v542, %v540
    %v707 = vpack.c.b16 %v543, %v541
    %v708 = vpack.c.b16 %v546, %v544
    %v709 = vpack.c.b16 %v547, %v545
    %v710 = vpack.c.b16 %v550, %v548
    %v711 = vpack.c.b16 %v551, %v549
    %v712 = vpack.c.b16 %v554, %v552
    %v713 = vpack.c.b16 %v555, %v553
    %v714 = vpack.c.b16 %v558, %v556
    %v715 = vpack.c.b16 %v559, %v557
    %v716 = vpack.c.b16 %v562, %v560
    %v717 = vpack.c.b16 %v563, %v561
    %v718 = vpack.c.b16 %v566, %v564
    %v719 = vpack.c.b16 %v567, %v565
    %v720 = vpack.c.b16 %v570, %v568
    %v721 = vpack.c.b16 %v571, %v569
    %v722 = vpack.c.b16 %v574, %v572
    %v723 = vpack.c.b16 %v575, %v573
    %v724 = vpack.c.b16 %v578, %v576
    %v725 = vpack.c.b16 %v579, %v577
    %v726 = vpack.c.b16 %v582, %v580
    %v727 = vpack.c.b16 %v583, %v581
    %v728 = vpack.c.b16 %v586, %v584
    %v729 = vpack.c.b16 %v587, %v585
    %v730 = vpack.c.b16 %v590, %v588
    %v731 = vpack.c.b16 %v591, %v589
    %v732 = vpack.c.b16 %v594, %v592
    %v733 = vpack.c.b16 %v595, %v593
    %v734 = vpack.c.b16 %v598, %v596
    %v735 = vpack.c.b16 %v599, %v597
    %v736 = vpack.c.b16 %v602, %v600
    %v737 = vpack.c.b16 %v603, %v601
    %v738 = vpack.c.b16 %v606, %v604
    %v739 = vpack.c.b16 %v607, %v605
    %v740 = vpack.c.b16 %v610, %v608
    %v741 = vpack.c.b16 %v611, %v609
    %v742 = vpack.c.b16 %v614, %v612
    %v743 = vpack.c.b16 %v615, %v613
    %872 = vmatprep.subr.bf16.mxu0 %v617
    %873 = vmatpush1.bf16.msra.mxu0 %v616
    %874 = vmatprep.subr.bf16.mxu0 %v619
    %875 = vmatpush1.bf16.msra.mxu0 %v618
    %876 = vmatprep.subr.bf16.mxu0 %v621
    %877 = vmatpush1.bf16.msra.mxu0 %v620
    %878 = vmatprep.subr.bf16.mxu0 %v623
    %879 = vmatpush1.bf16.msra.mxu0 %v622
    %880 = vmatprep.subr.bf16.mxu0 %v625
    %881 = vmatpush1.bf16.msra.mxu0 %v624
    %882 = vmatprep.subr.bf16.mxu0 %v627
    %883 = vmatpush1.bf16.msra.mxu0 %v626
    %884 = vmatprep.subr.bf16.mxu0 %v629
    %885 = vmatpush1.bf16.msra.mxu0 %v628
    %886 = vmatprep.subr.bf16.mxu0 %v631
    %887 = vmatpush1.bf16.msra.mxu0 %v630
    %888 = vmatprep.subr.bf16.mxu0 %v633
    %889 = vmatpush1.bf16.msra.mxu0 %v632
    %890 = vmatprep.subr.bf16.mxu0 %v635
    %891 = vmatpush1.bf16.msra.mxu0 %v634
    %892 = vmatprep.subr.bf16.mxu0 %v637
    %893 = vmatpush1.bf16.msra.mxu0 %v636
    %894 = vmatprep.subr.bf16.mxu0 %v639
    %895 = vmatpush1.bf16.msra.mxu0 %v638
    %896 = vmatprep.subr.bf16.mxu0 %v641
    %897 = vmatpush1.bf16.msra.mxu0 %v640
    %898 = vmatprep.subr.bf16.mxu0 %v643
    %899 = vmatpush1.bf16.msra.mxu0 %v642
    %900 = vmatprep.subr.bf16.mxu0 %v645
    %901 = vmatpush1.bf16.msra.mxu0 %v644
    %902 = vmatprep.subr.bf16.mxu0 %v647
    %903 = vmatpush1.bf16.msra.mxu0 %v646
    %904 = vmatprep.mubr.bf16.mxu0 %v217
    %905 = vmatmul.mubr.bf16.gmra.mrb[0].mxu0 %v216
    %v906 = vpop.f32.mrb[0].mxu0
    %v907 = vadd.f32 %v197, %v906
    %v908 = vpop.f32.mrb[0].mxu0
    %v909 = vadd.f32 %v201, %v908
    %v910 = vpop.f32.mrb[0].mxu0
    %v911 = vpop.f32.mrb[0].mxu0
    %912 = vdwg.mxu0
    %913 = vmatprep.subr.bf16.mxu0 %v649
    %914 = vmatpush1.bf16.msra.mxu0 %v648
    %915 = vmatprep.subr.bf16.mxu0 %v651
    %916 = vmatpush1.bf16.msra.mxu0 %v650
    %917 = vmatprep.subr.bf16.mxu0 %v653
    %918 = vmatpush1.bf16.msra.mxu0 %v652
    %919 = vmatprep.subr.bf16.mxu0 %v655
    %920 = vmatpush1.bf16.msra.mxu0 %v654
    %921 = vmatprep.subr.bf16.mxu0 %v657
    %922 = vmatpush1.bf16.msra.mxu0 %v656
    %923 = vmatprep.subr.bf16.mxu0 %v659
    %924 = vmatpush1.bf16.msra.mxu0 %v658
    %925 = vmatprep.subr.bf16.mxu0 %v661
    %926 = vmatpush1.bf16.msra.mxu0 %v660
    %927 = vmatprep.subr.bf16.mxu0 %v663
    %928 = vmatpush1.bf16.msra.mxu0 %v662
    %929 = vmatprep.subr.bf16.mxu0 %v665
    %930 = vmatpush1.bf16.msra.mxu0 %v664
    %931 = vmatprep.subr.bf16.mxu0 %v667
    %932 = vmatpush1.bf16.msra.mxu0 %v666
    %933 = vmatprep.subr.bf16.mxu0 %v669
    %934 = vmatpush1.bf16.msra.mxu0 %v668
    %935 = vmatprep.subr.bf16.mxu0 %v671
    %936 = vmatpush1.bf16.msra.mxu0 %v670
    %937 = vmatprep.subr.bf16.mxu0 %v673
    %938 = vmatpush1.bf16.msra.mxu0 %v672
    %939 = vmatprep.subr.bf16.mxu0 %v675
    %940 = vmatpush1.bf16.msra.mxu0 %v674
    %941 = vmatprep.subr.bf16.mxu0 %v677
    %942 = vmatpush1.bf16.msra.mxu0 %v676
    %943 = vmatprep.subr.bf16.mxu0 %v679
    %944 = vmatpush1.bf16.msra.mxu0 %v678
    %945 = vmatprep.mubr.bf16.mxu0 %v219
    %946 = vmatmul.mubr.bf16.gmra.mrb[0].mxu0 %v218
    %v947 = vpop.f32.mrb[0].mxu0
    %v948 = vadd.f32 %v907, %v947
    %v949 = vpop.f32.mrb[0].mxu0
    %v950 = vadd.f32 %v909, %v949
    %v951 = vpop.f32.mrb[0].mxu0
    %v952 = vpop.f32.mrb[0].mxu0
    %953 = vdwg.mxu0
    %954 = vmatprep.subr.bf16.mxu0 %v681
    %955 = vmatpush1.bf16.msra.mxu0 %v680
    %956 = vmatprep.subr.bf16.mxu0 %v683
    %957 = vmatpush1.bf16.msra.mxu0 %v682
    %958 = vmatprep.subr.bf16.mxu0 %v685
    %959 = vmatpush1.bf16.msra.mxu0 %v684
    %960 = vmatprep.subr.bf16.mxu0 %v687
    %961 = vmatpush1.bf16.msra.mxu0 %v686
    %962 = vmatprep.subr.bf16.mxu0 %v689
    %963 = vmatpush1.bf16.msra.mxu0 %v688
    %964 = vmatprep.subr.bf16.mxu0 %v691
    %965 = vmatpush1.bf16.msra.mxu0 %v690
    %966 = vmatprep.subr.bf16.mxu0 %v693
    %967 = vmatpush1.bf16.msra.mxu0 %v692
    %968 = vmatprep.subr.bf16.mxu0 %v695
    %969 = vmatpush1.bf16.msra.mxu0 %v694
    %970 = vmatprep.subr.bf16.mxu0 %v697
    %971 = vmatpush1.bf16.msra.mxu0 %v696
    %972 = vmatprep.subr.bf16.mxu0 %v699
    %973 = vmatpush1.bf16.msra.mxu0 %v698
    %974 = vmatprep.subr.bf16.mxu0 %v701
    %975 = vmatpush1.bf16.msra.mxu0 %v700
    %976 = vmatprep.subr.bf16.mxu0 %v703
    %977 = vmatpush1.bf16.msra.mxu0 %v702
    %978 = vmatprep.subr.bf16.mxu0 %v705
    %979 = vmatpush1.bf16.msra.mxu0 %v704
    %980 = vmatprep.subr.bf16.mxu0 %v707
    %981 = vmatpush1.bf16.msra.mxu0 %v706
    %982 = vmatprep.subr.bf16.mxu0 %v709
    %983 = vmatpush1.bf16.msra.mxu0 %v708
    %984 = vmatprep.subr.bf16.mxu0 %v711
    %985 = vmatpush1.bf16.msra.mxu0 %v710
    %986 = vmatprep.mubr.bf16.mxu0 %v221
    %987 = vmatmul.mubr.bf16.gmra.mrb[0].mxu0 %v220
    %v988 = vpop.f32.mrb[0].mxu0
    %v989 = vadd.f32 %v948, %v988
    %v990 = vpop.f32.mrb[0].mxu0
    %v991 = vadd.f32 %v950, %v990
    %v992 = vpop.f32.mrb[0].mxu0
    %v993 = vpop.f32.mrb[0].mxu0
    %994 = vdwg.mxu0
    %995 = vmatprep.subr.bf16.mxu0 %v713
    %996 = vmatpush1.bf16.msra.mxu0 %v712
    %997 = vmatprep.subr.bf16.mxu0 %v715
    %998 = vmatpush1.bf16.msra.mxu0 %v714
    %999 = vmatprep.subr.bf16.mxu0 %v717
    %1000 = vmatpush1.bf16.msra.mxu0 %v716
    %1001 = vmatprep.subr.bf16.mxu0 %v719
    %1002 = vmatpush1.bf16.msra.mxu0 %v718
    %1003 = vmatprep.subr.bf16.mxu0 %v721
    %1004 = vmatpush1.bf16.msra.mxu0 %v720
    %1005 = vmatprep.subr.bf16.mxu0 %v723
    %1006 = vmatpush1.bf16.msra.mxu0 %v722
    %1007 = vmatprep.subr.bf16.mxu0 %v725
    %1008 = vmatpush1.bf16.msra.mxu0 %v724
    %1009 = vmatprep.subr.bf16.mxu0 %v727
    %1010 = vmatpush1.bf16.msra.mxu0 %v726
    %1011 = vmatprep.subr.bf16.mxu0 %v729
    %1012 = vmatpush1.bf16.msra.mxu0 %v728
    %1013 = vmatprep.subr.bf16.mxu0 %v731
    %1014 = vmatpush1.bf16.msra.mxu0 %v730
    %1015 = vmatprep.subr.bf16.mxu0 %v733
    %1016 = vmatpush1.bf16.msra.mxu0 %v732
    %1017 = vmatprep.subr.bf16.mxu0 %v735
    %1018 = vmatpush1.bf16.msra.mxu0 %v734
    %1019 = vmatprep.subr.bf16.mxu0 %v737
    %1020 = vmatpush1.bf16.msra.mxu0 %v736
    %1021 = vmatprep.subr.bf16.mxu0 %v739
    %1022 = vmatpush1.bf16.msra.mxu0 %v738
    %1023 = vmatprep.subr.bf16.mxu0 %v741
    %1024 = vmatpush1.bf16.msra.mxu0 %v740
    %1025 = vmatprep.subr.bf16.mxu0 %v743
    %1026 = vmatpush1.bf16.msra.mxu0 %v742
    %1027 = vmatprep.mubr.bf16.mxu0 %v223
    %1028 = vmatmul.mubr.bf16.gmra.mrb[0].mxu0 %v222
    %v1029 = vpop.f32.mrb[0].mxu0
    %v1030 = vadd.f32 %v989, %v1029
    %v1031 = vpop.f32.mrb[0].mxu0
    %v1032 = vadd.f32 %v991, %v1031
    %v1033 = vpop.f32.mrb[0].mxu0
    %v1034 = vpop.f32.mrb[0].mxu0
    %1035 = vdwg.mxu0
    %v1036 = vmax.f32 %v1030, 0.0
    %v1037 = vmax.f32 %v1032, 0.0
    %v1038 = vpack.c.bf16 %v1036, %v1036
    %v1039 = vpack.c.bf16 %v1037, %v1037
    %v1040 = vld [vmem:[#allocation7] sm:$0xff]
    %v1041 = vld [vmem:[#allocation7 + $0x8] sm:$0xff]
    %v1042 = vld [vmem:[#allocation7 + $0x10] sm:$0xff]
    %v1043 = vld [vmem:[#allocation7 + $0x18] sm:$0xff]
    %v1044 = vld [vmem:[#allocation7 + $0x20] sm:$0xff]
    %v1045 = vld [vmem:[#allocation7 + $0x28] sm:$0xff]
    %v1046 = vld [vmem:[#allocation7 + $0x30] sm:$0xff]
    %v1047 = vld [vmem:[#allocation7 + $0x38] sm:$0xff]
    %v1048 = vld [vmem:[#allocation7 + $0x40] sm:$0xff]
    %v1049 = vld [vmem:[#allocation7 + $0x48] sm:$0xff]
    %v1050 = vld [vmem:[#allocation7 + $0x50] sm:$0xff]
    %v1051 = vld [vmem:[#allocation7 + $0x58] sm:$0xff]
    %v1052 = vld [vmem:[#allocation7 + $0x60] sm:$0xff]
    %v1053 = vld [vmem:[#allocation7 + $0x68] sm:$0xff]
    %v1054 = vld [vmem:[#allocation7 + $0x70] sm:$0xff]
    %v1055 = vld [vmem:[#allocation7 + $0x78] sm:$0xff]
    %v1056 = vld [vmem:[#allocation7 + $0x80] sm:$0xff]
    %v1057 = vld [vmem:[#allocation7 + $0x88] sm:$0xff]
    %v1058 = vld [vmem:[#allocation7 + $0x90] sm:$0xff]
    %v1059 = vld [vmem:[#allocation7 + $0x98] sm:$0xff]
    %v1060 = vld [vmem:[#allocation7 + $0xa0] sm:$0xff]
    %v1061 = vld [vmem:[#allocation7 + $0xa8] sm:$0xff]
    %v1062 = vld [vmem:[#allocation7 + $0xb0] sm:$0xff]
    %v1063 = vld [vmem:[#allocation7 + $0xb8] sm:$0xff]
    %v1064 = vld [vmem:[#allocation7 + $0xc0] sm:$0xff]
    %v1065 = vld [vmem:[#allocation7 + $0xc8] sm:$0xff]
    %v1066 = vld [vmem:[#allocation7 + $0xd0] sm:$0xff]
    %v1067 = vld [vmem:[#allocation7 + $0xd8] sm:$0xff]
    %v1068 = vld [vmem:[#allocation7 + $0xe0] sm:$0xff]
    %v1069 = vld [vmem:[#allocation7 + $0xe8] sm:$0xff]
    %v1070 = vld [vmem:[#allocation7 + $0xf0] sm:$0xff]
    %v1071 = vld [vmem:[#allocation7 + $0xf8] sm:$0xff]
    %v1072 = vld [vmem:[#allocation7 + $0x100] sm:$0xff]
    %v1073 = vld [vmem:[#allocation7 + $0x108] sm:$0xff]
    %v1074 = vld [vmem:[#allocation7 + $0x110] sm:$0xff]
    %v1075 = vld [vmem:[#allocation7 + $0x118] sm:$0xff]
    %v1076 = vld [vmem:[#allocation7 + $0x120] sm:$0xff]
    %v1077 = vld [vmem:[#allocation7 + $0x128] sm:$0xff]
    %v1078 = vld [vmem:[#allocation7 + $0x130] sm:$0xff]
    %v1079 = vld [vmem:[#allocation7 + $0x138] sm:$0xff]
    %v1080 = vld [vmem:[#allocation7 + $0x140] sm:$0xff]
    %v1081 = vld [vmem:[#allocation7 + $0x148] sm:$0xff]
    %v1082 = vld [vmem:[#allocation7 + $0x150] sm:$0xff]
    %v1083 = vld [vmem:[#allocation7 + $0x158] sm:$0xff]
    %v1084 = vld [vmem:[#allocation7 + $0x160] sm:$0xff]
    %v1085 = vld [vmem:[#allocation7 + $0x168] sm:$0xff]
    %v1086 = vld [vmem:[#allocation7 + $0x170] sm:$0xff]
    %v1087 = vld [vmem:[#allocation7 + $0x178] sm:$0xff]
    %v1088 = vld [vmem:[#allocation7 + $0x180] sm:$0xff]
    %v1089 = vld [vmem:[#allocation7 + $0x188] sm:$0xff]
    %v1090 = vld [vmem:[#allocation7 + $0x190] sm:$0xff]
    %v1091 = vld [vmem:[#allocation7 + $0x198] sm:$0xff]
    %v1092 = vld [vmem:[#allocation7 + $0x1a0] sm:$0xff]
    %v1093 = vld [vmem:[#allocation7 + $0x1a8] sm:$0xff]
    %v1094 = vld [vmem:[#allocation7 + $0x1b0] sm:$0xff]
    %v1095 = vld [vmem:[#allocation7 + $0x1b8] sm:$0xff]
    %v1096 = vld [vmem:[#allocation7 + $0x1c0] sm:$0xff]
    %v1097 = vld [vmem:[#allocation7 + $0x1c8] sm:$0xff]
    %v1098 = vld [vmem:[#allocation7 + $0x1d0] sm:$0xff]
    %v1099 = vld [vmem:[#allocation7 + $0x1d8] sm:$0xff]
    %v1100 = vld [vmem:[#allocation7 + $0x1e0] sm:$0xff]
    %v1101 = vld [vmem:[#allocation7 + $0x1e8] sm:$0xff]
    %v1102 = vld [vmem:[#allocation7 + $0x1f0] sm:$0xff]
    %v1103 = vld [vmem:[#allocation7 + $0x1f8] sm:$0xff]
    %v1104 = vld [vmem:[#allocation7 + $0x200] sm:$0xff]
    %v1105 = vld [vmem:[#allocation7 + $0x208] sm:$0xff]
    %v1106 = vld [vmem:[#allocation7 + $0x210] sm:$0xff]
    %v1107 = vld [vmem:[#allocation7 + $0x218] sm:$0xff]
    %v1108 = vld [vmem:[#allocation7 + $0x220] sm:$0xff]
    %v1109 = vld [vmem:[#allocation7 + $0x228] sm:$0xff]
    %v1110 = vld [vmem:[#allocation7 + $0x230] sm:$0xff]
    %v1111 = vld [vmem:[#allocation7 + $0x238] sm:$0xff]
    %v1112 = vld [vmem:[#allocation7 + $0x240] sm:$0xff]
    %v1113 = vld [vmem:[#allocation7 + $0x248] sm:$0xff]
    %v1114 = vld [vmem:[#allocation7 + $0x250] sm:$0xff]
    %v1115 = vld [vmem:[#allocation7 + $0x258] sm:$0xff]
    %v1116 = vld [vmem:[#allocation7 + $0x260] sm:$0xff]
    %v1117 = vld [vmem:[#allocation7 + $0x268] sm:$0xff]
    %v1118 = vld [vmem:[#allocation7 + $0x270] sm:$0xff]
    %v1119 = vld [vmem:[#allocation7 + $0x278] sm:$0xff]
    %v1120 = vld [vmem:[#allocation7 + $0x280] sm:$0xff]
    %v1121 = vld [vmem:[#allocation7 + $0x288] sm:$0xff]
    %v1122 = vld [vmem:[#allocation7 + $0x290] sm:$0xff]
    %v1123 = vld [vmem:[#allocation7 + $0x298] sm:$0xff]
    %v1124 = vld [vmem:[#allocation7 + $0x2a0] sm:$0xff]
    %v1125 = vld [vmem:[#allocation7 + $0x2a8] sm:$0xff]
    %v1126 = vld [vmem:[#allocation7 + $0x2b0] sm:$0xff]
    %v1127 = vld [vmem:[#allocation7 + $0x2b8] sm:$0xff]
    %v1128 = vld [vmem:[#allocation7 + $0x2c0] sm:$0xff]
    %v1129 = vld [vmem:[#allocation7 + $0x2c8] sm:$0xff]
    %v1130 = vld [vmem:[#allocation7 + $0x2d0] sm:$0xff]
    %v1131 = vld [vmem:[#allocation7 + $0x2d8] sm:$0xff]
    %v1132 = vld [vmem:[#allocation7 + $0x2e0] sm:$0xff]
    %v1133 = vld [vmem:[#allocation7 + $0x2e8] sm:$0xff]
    %v1134 = vld [vmem:[#allocation7 + $0x2f0] sm:$0xff]
    %v1135 = vld [vmem:[#allocation7 + $0x2f8] sm:$0xff]
    %v1136 = vld [vmem:[#allocation7 + $0x300] sm:$0xff]
    %v1137 = vld [vmem:[#allocation7 + $0x308] sm:$0xff]
    %v1138 = vld [vmem:[#allocation7 + $0x310] sm:$0xff]
    %v1139 = vld [vmem:[#allocation7 + $0x318] sm:$0xff]
    %v1140 = vld [vmem:[#allocation7 + $0x320] sm:$0xff]
    %v1141 = vld [vmem:[#allocation7 + $0x328] sm:$0xff]
    %v1142 = vld [vmem:[#allocation7 + $0x330] sm:$0xff]
    %v1143 = vld [vmem:[#allocation7 + $0x338] sm:$0xff]
    %v1144 = vld [vmem:[#allocation7 + $0x340] sm:$0xff]
    %v1145 = vld [vmem:[#allocation7 + $0x348] sm:$0xff]
    %v1146 = vld [vmem:[#allocation7 + $0x350] sm:$0xff]
    %v1147 = vld [vmem:[#allocation7 + $0x358] sm:$0xff]
    %v1148 = vld [vmem:[#allocation7 + $0x360] sm:$0xff]
    %v1149 = vld [vmem:[#allocation7 + $0x368] sm:$0xff]
    %v1150 = vld [vmem:[#allocation7 + $0x370] sm:$0xff]
    %v1151 = vld [vmem:[#allocation7 + $0x378] sm:$0xff]
    %v1152 = vld [vmem:[#allocation7 + $0x380] sm:$0xff]
    %v1153 = vld [vmem:[#allocation7 + $0x388] sm:$0xff]
    %v1154 = vld [vmem:[#allocation7 + $0x390] sm:$0xff]
    %v1155 = vld [vmem:[#allocation7 + $0x398] sm:$0xff]
    %v1156 = vld [vmem:[#allocation7 + $0x3a0] sm:$0xff]
    %v1157 = vld [vmem:[#allocation7 + $0x3a8] sm:$0xff]
    %v1158 = vld [vmem:[#allocation7 + $0x3b0] sm:$0xff]
    %v1159 = vld [vmem:[#allocation7 + $0x3b8] sm:$0xff]
    %v1160 = vld [vmem:[#allocation7 + $0x3c0] sm:$0xff]
    %v1161 = vld [vmem:[#allocation7 + $0x3c8] sm:$0xff]
    %v1162 = vld [vmem:[#allocation7 + $0x3d0] sm:$0xff]
    %v1163 = vld [vmem:[#allocation7 + $0x3d8] sm:$0xff]
    %v1164 = vld [vmem:[#allocation7 + $0x3e0] sm:$0xff]
    %v1165 = vld [vmem:[#allocation7 + $0x3e8] sm:$0xff]
    %v1166 = vld [vmem:[#allocation7 + $0x3f0] sm:$0xff]
    %v1167 = vld [vmem:[#allocation7 + $0x3f8] sm:$0xff]
    %v1168 = vld [vmem:[%s4] sm:$0xff]
    %v1170 = vlaneseq
    %v1171 = vshrl.u32 %v1170, 7
    %v1172 = vsub.s32 0, %v1171
    %v1173 = vrot.slane %v1168, %v1172
    %v1174 = vlaneseq
    %v1175 = vshrl.u32 %v1174, 7
    %v1176 = vsub.s32 1, %v1175
    %v1177 = vrot.slane %v1168, %v1176
    %v1178 = vlaneseq
    %v1179 = vshrl.u32 %v1178, 7
    %v1180 = vsub.s32 2, %v1179
    %v1181 = vrot.slane %v1168, %v1180
    %v1182 = vlaneseq
    %v1183 = vshrl.u32 %v1182, 7
    %v1184 = vsub.s32 3, %v1183
    %v1185 = vrot.slane %v1168, %v1184
    %v1186 = vlaneseq
    %v1187 = vshrl.u32 %v1186, 7
    %v1188 = vsub.s32 4, %v1187
    %v1189 = vrot.slane %v1168, %v1188
    %v1190 = vlaneseq
    %v1191 = vshrl.u32 %v1190, 7
    %v1192 = vsub.s32 5, %v1191
    %v1193 = vrot.slane %v1168, %v1192
    %v1194 = vlaneseq
    %v1195 = vshrl.u32 %v1194, 7
    %v1196 = vsub.s32 6, %v1195
    %v1197 = vrot.slane %v1168, %v1196
    %v1198 = vlaneseq
    %v1199 = vshrl.u32 %v1198, 7
    %v1200 = vsub.s32 7, %v1199
    %v1201 = vrot.slane %v1168, %v1200
    %v1338 = vunpack.c.l.b16 %v1040
    %v1339 = vunpack.c.h.b16 %v1040
    %v1340 = vunpack.c.l.b16 %v1041
    %v1341 = vunpack.c.h.b16 %v1041
    %v1342 = vunpack.c.l.b16 %v1042
    %v1343 = vunpack.c.h.b16 %v1042
    %v1344 = vunpack.c.l.b16 %v1043
    %v1345 = vunpack.c.h.b16 %v1043
    %v1346 = vunpack.c.l.b16 %v1044
    %v1347 = vunpack.c.h.b16 %v1044
    %v1348 = vunpack.c.l.b16 %v1045
    %v1349 = vunpack.c.h.b16 %v1045
    %v1350 = vunpack.c.l.b16 %v1046
    %v1351 = vunpack.c.h.b16 %v1046
    %v1352 = vunpack.c.l.b16 %v1047
    %v1353 = vunpack.c.h.b16 %v1047
    %v1354 = vunpack.c.l.b16 %v1048
    %v1355 = vunpack.c.h.b16 %v1048
    %v1356 = vunpack.c.l.b16 %v1049
    %v1357 = vunpack.c.h.b16 %v1049
    %v1358 = vunpack.c.l.b16 %v1050
    %v1359 = vunpack.c.h.b16 %v1050
    %v1360 = vunpack.c.l.b16 %v1051
    %v1361 = vunpack.c.h.b16 %v1051
    %v1362 = vunpack.c.l.b16 %v1052
    %v1363 = vunpack.c.h.b16 %v1052
    %v1364 = vunpack.c.l.b16 %v1053
    %v1365 = vunpack.c.h.b16 %v1053
    %v1366 = vunpack.c.l.b16 %v1054
    %v1367 = vunpack.c.h.b16 %v1054
    %v1368 = vunpack.c.l.b16 %v1055
    %v1369 = vunpack.c.h.b16 %v1055
    %v1370 = vunpack.c.l.b16 %v1056
    %v1371 = vunpack.c.h.b16 %v1056
    %v1372 = vunpack.c.l.b16 %v1057
    %v1373 = vunpack.c.h.b16 %v1057
    %v1374 = vunpack.c.l.b16 %v1058
    %v1375 = vunpack.c.h.b16 %v1058
    %v1376 = vunpack.c.l.b16 %v1059
    %v1377 = vunpack.c.h.b16 %v1059
    %v1378 = vunpack.c.l.b16 %v1060
    %v1379 = vunpack.c.h.b16 %v1060
    %v1380 = vunpack.c.l.b16 %v1061
    %v1381 = vunpack.c.h.b16 %v1061
    %v1382 = vunpack.c.l.b16 %v1062
    %v1383 = vunpack.c.h.b16 %v1062
    %v1384 = vunpack.c.l.b16 %v1063
    %v1385 = vunpack.c.h.b16 %v1063
    %v1386 = vunpack.c.l.b16 %v1064
    %v1387 = vunpack.c.h.b16 %v1064
    %v1388 = vunpack.c.l.b16 %v1065
    %v1389 = vunpack.c.h.b16 %v1065
    %v1390 = vunpack.c.l.b16 %v1066
    %v1391 = vunpack.c.h.b16 %v1066
    %v1392 = vunpack.c.l.b16 %v1067
    %v1393 = vunpack.c.h.b16 %v1067
    %v1394 = vunpack.c.l.b16 %v1068
    %v1395 = vunpack.c.h.b16 %v1068
    %v1396 = vunpack.c.l.b16 %v1069
    %v1397 = vunpack.c.h.b16 %v1069
    %v1398 = vunpack.c.l.b16 %v1070
    %v1399 = vunpack.c.h.b16 %v1070
    %v1400 = vunpack.c.l.b16 %v1071
    %v1401 = vunpack.c.h.b16 %v1071
    %v1402 = vunpack.c.l.b16 %v1072
    %v1403 = vunpack.c.h.b16 %v1072
    %v1404 = vunpack.c.l.b16 %v1073
    %v1405 = vunpack.c.h.b16 %v1073
    %v1406 = vunpack.c.l.b16 %v1074
    %v1407 = vunpack.c.h.b16 %v1074
    %v1408 = vunpack.c.l.b16 %v1075
    %v1409 = vunpack.c.h.b16 %v1075
    %v1410 = vunpack.c.l.b16 %v1076
    %v1411 = vunpack.c.h.b16 %v1076
    %v1412 = vunpack.c.l.b16 %v1077
    %v1413 = vunpack.c.h.b16 %v1077
    %v1414 = vunpack.c.l.b16 %v1078
    %v1415 = vunpack.c.h.b16 %v1078
    %v1416 = vunpack.c.l.b16 %v1079
    %v1417 = vunpack.c.h.b16 %v1079
    %v1418 = vunpack.c.l.b16 %v1080
    %v1419 = vunpack.c.h.b16 %v1080
    %v1420 = vunpack.c.l.b16 %v1081
    %v1421 = vunpack.c.h.b16 %v1081
    %v1422 = vunpack.c.l.b16 %v1082
    %v1423 = vunpack.c.h.b16 %v1082
    %v1424 = vunpack.c.l.b16 %v1083
    %v1425 = vunpack.c.h.b16 %v1083
    %v1426 = vunpack.c.l.b16 %v1084
    %v1427 = vunpack.c.h.b16 %v1084
    %v1428 = vunpack.c.l.b16 %v1085
    %v1429 = vunpack.c.h.b16 %v1085
    %v1430 = vunpack.c.l.b16 %v1086
    %v1431 = vunpack.c.h.b16 %v1086
    %v1432 = vunpack.c.l.b16 %v1087
    %v1433 = vunpack.c.h.b16 %v1087
    %v1434 = vunpack.c.l.b16 %v1088
    %v1435 = vunpack.c.h.b16 %v1088
    %v1436 = vunpack.c.l.b16 %v1089
    %v1437 = vunpack.c.h.b16 %v1089
    %v1438 = vunpack.c.l.b16 %v1090
    %v1439 = vunpack.c.h.b16 %v1090
    %v1440 = vunpack.c.l.b16 %v1091
    %v1441 = vunpack.c.h.b16 %v1091
    %v1442 = vunpack.c.l.b16 %v1092
    %v1443 = vunpack.c.h.b16 %v1092
    %v1444 = vunpack.c.l.b16 %v1093
    %v1445 = vunpack.c.h.b16 %v1093
    %v1446 = vunpack.c.l.b16 %v1094
    %v1447 = vunpack.c.h.b16 %v1094
    %v1448 = vunpack.c.l.b16 %v1095
    %v1449 = vunpack.c.h.b16 %v1095
    %v1450 = vunpack.c.l.b16 %v1096
    %v1451 = vunpack.c.h.b16 %v1096
    %v1452 = vunpack.c.l.b16 %v1097
    %v1453 = vunpack.c.h.b16 %v1097
    %v1454 = vunpack.c.l.b16 %v1098
    %v1455 = vunpack.c.h.b16 %v1098
    %v1456 = vunpack.c.l.b16 %v1099
    %v1457 = vunpack.c.h.b16 %v1099
    %v1458 = vunpack.c.l.b16 %v1100
    %v1459 = vunpack.c.h.b16 %v1100
    %v1460 = vunpack.c.l.b16 %v1101
    %v1461 = vunpack.c.h.b16 %v1101
    %v1462 = vunpack.c.l.b16 %v1102
    %v1463 = vunpack.c.h.b16 %v1102
    %v1464 = vunpack.c.l.b16 %v1103
    %v1465 = vunpack.c.h.b16 %v1103
    %v1466 = vunpack.c.l.b16 %v1104
    %v1467 = vunpack.c.h.b16 %v1104
    %v1468 = vunpack.c.l.b16 %v1105
    %v1469 = vunpack.c.h.b16 %v1105
    %v1470 = vunpack.c.l.b16 %v1106
    %v1471 = vunpack.c.h.b16 %v1106
    %v1472 = vunpack.c.l.b16 %v1107
    %v1473 = vunpack.c.h.b16 %v1107
    %v1474 = vunpack.c.l.b16 %v1108
    %v1475 = vunpack.c.h.b16 %v1108
    %v1476 = vunpack.c.l.b16 %v1109
    %v1477 = vunpack.c.h.b16 %v1109
    %v1478 = vunpack.c.l.b16 %v1110
    %v1479 = vunpack.c.h.b16 %v1110
    %v1480 = vunpack.c.l.b16 %v1111
    %v1481 = vunpack.c.h.b16 %v1111
    %v1482 = vunpack.c.l.b16 %v1112
    %v1483 = vunpack.c.h.b16 %v1112
    %v1484 = vunpack.c.l.b16 %v1113
    %v1485 = vunpack.c.h.b16 %v1113
    %v1486 = vunpack.c.l.b16 %v1114
    %v1487 = vunpack.c.h.b16 %v1114
    %v1488 = vunpack.c.l.b16 %v1115
    %v1489 = vunpack.c.h.b16 %v1115
    %v1490 = vunpack.c.l.b16 %v1116
    %v1491 = vunpack.c.h.b16 %v1116
    %v1492 = vunpack.c.l.b16 %v1117
    %v1493 = vunpack.c.h.b16 %v1117
    %v1494 = vunpack.c.l.b16 %v1118
    %v1495 = vunpack.c.h.b16 %v1118
    %v1496 = vunpack.c.l.b16 %v1119
    %v1497 = vunpack.c.h.b16 %v1119
    %v1498 = vunpack.c.l.b16 %v1120
    %v1499 = vunpack.c.h.b16 %v1120
    %v1500 = vunpack.c.l.b16 %v1121
    %v1501 = vunpack.c.h.b16 %v1121
    %v1502 = vunpack.c.l.b16 %v1122
    %v1503 = vunpack.c.h.b16 %v1122
    %v1504 = vunpack.c.l.b16 %v1123
    %v1505 = vunpack.c.h.b16 %v1123
    %v1506 = vunpack.c.l.b16 %v1124
    %v1507 = vunpack.c.h.b16 %v1124
    %v1508 = vunpack.c.l.b16 %v1125
    %v1509 = vunpack.c.h.b16 %v1125
    %v1510 = vunpack.c.l.b16 %v1126
    %v1511 = vunpack.c.h.b16 %v1126
    %v1512 = vunpack.c.l.b16 %v1127
    %v1513 = vunpack.c.h.b16 %v1127
    %v1514 = vunpack.c.l.b16 %v1128
    %v1515 = vunpack.c.h.b16 %v1128
    %v1516 = vunpack.c.l.b16 %v1129
    %v1517 = vunpack.c.h.b16 %v1129
    %v1518 = vunpack.c.l.b16 %v1130
    %v1519 = vunpack.c.h.b16 %v1130
    %v1520 = vunpack.c.l.b16 %v1131
    %v1521 = vunpack.c.h.b16 %v1131
    %v1522 = vunpack.c.l.b16 %v1132
    %v1523 = vunpack.c.h.b16 %v1132
    %v1524 = vunpack.c.l.b16 %v1133
    %v1525 = vunpack.c.h.b16 %v1133
    %v1526 = vunpack.c.l.b16 %v1134
    %v1527 = vunpack.c.h.b16 %v1134
    %v1528 = vunpack.c.l.b16 %v1135
    %v1529 = vunpack.c.h.b16 %v1135
    %v1530 = vunpack.c.l.b16 %v1136
    %v1531 = vunpack.c.h.b16 %v1136
    %v1532 = vunpack.c.l.b16 %v1137
    %v1533 = vunpack.c.h.b16 %v1137
    %v1534 = vunpack.c.l.b16 %v1138
    %v1535 = vunpack.c.h.b16 %v1138
    %v1536 = vunpack.c.l.b16 %v1139
    %v1537 = vunpack.c.h.b16 %v1139
    %v1538 = vunpack.c.l.b16 %v1140
    %v1539 = vunpack.c.h.b16 %v1140
    %v1540 = vunpack.c.l.b16 %v1141
    %v1541 = vunpack.c.h.b16 %v1141
    %v1542 = vunpack.c.l.b16 %v1142
    %v1543 = vunpack.c.h.b16 %v1142
    %v1544 = vunpack.c.l.b16 %v1143
    %v1545 = vunpack.c.h.b16 %v1143
    %v1546 = vunpack.c.l.b16 %v1144
    %v1547 = vunpack.c.h.b16 %v1144
    %v1548 = vunpack.c.l.b16 %v1145
    %v1549 = vunpack.c.h.b16 %v1145
    %v1550 = vunpack.c.l.b16 %v1146
    %v1551 = vunpack.c.h.b16 %v1146
    %v1552 = vunpack.c.l.b16 %v1147
    %v1553 = vunpack.c.h.b16 %v1147
    %v1554 = vunpack.c.l.b16 %v1148
    %v1555 = vunpack.c.h.b16 %v1148
    %v1556 = vunpack.c.l.b16 %v1149
    %v1557 = vunpack.c.h.b16 %v1149
    %v1558 = vunpack.c.l.b16 %v1150
    %v1559 = vunpack.c.h.b16 %v1150
    %v1560 = vunpack.c.l.b16 %v1151
    %v1561 = vunpack.c.h.b16 %v1151
    %v1562 = vunpack.c.l.b16 %v1152
    %v1563 = vunpack.c.h.b16 %v1152
    %v1564 = vunpack.c.l.b16 %v1153
    %v1565 = vunpack.c.h.b16 %v1153
    %v1566 = vunpack.c.l.b16 %v1154
    %v1567 = vunpack.c.h.b16 %v1154
    %v1568 = vunpack.c.l.b16 %v1155
    %v1569 = vunpack.c.h.b16 %v1155
    %v1570 = vunpack.c.l.b16 %v1156
    %v1571 = vunpack.c.h.b16 %v1156
    %v1572 = vunpack.c.l.b16 %v1157
    %v1573 = vunpack.c.h.b16 %v1157
    %v1574 = vunpack.c.l.b16 %v1158
    %v1575 = vunpack.c.h.b16 %v1158
    %v1576 = vunpack.c.l.b16 %v1159
    %v1577 = vunpack.c.h.b16 %v1159
    %v1578 = vunpack.c.l.b16 %v1160
    %v1579 = vunpack.c.h.b16 %v1160
    %v1580 = vunpack.c.l.b16 %v1161
    %v1581 = vunpack.c.h.b16 %v1161
    %v1582 = vunpack.c.l.b16 %v1162
    %v1583 = vunpack.c.h.b16 %v1162
    %v1584 = vunpack.c.l.b16 %v1163
    %v1585 = vunpack.c.h.b16 %v1163
    %v1586 = vunpack.c.l.b16 %v1164
    %v1587 = vunpack.c.h.b16 %v1164
    %v1588 = vunpack.c.l.b16 %v1165
    %v1589 = vunpack.c.h.b16 %v1165
    %v1590 = vunpack.c.l.b16 %v1166
    %v1591 = vunpack.c.h.b16 %v1166
    %v1592 = vunpack.c.l.b16 %v1167
    %v1593 = vunpack.c.h.b16 %v1167
    %v1594 = vpack.c.b16 %v1346, %v1338
    %v1595 = vpack.c.b16 %v1347, %v1339
    %v1596 = vpack.c.b16 %v1348, %v1340
    %v1597 = vpack.c.b16 %v1349, %v1341
    %v1598 = vpack.c.b16 %v1350, %v1342
    %v1599 = vpack.c.b16 %v1351, %v1343
    %v1600 = vpack.c.b16 %v1352, %v1344
    %v1601 = vpack.c.b16 %v1353, %v1345
    %v1602 = vpack.c.b16 %v1362, %v1354
    %v1603 = vpack.c.b16 %v1363, %v1355
    %v1604 = vpack.c.b16 %v1364, %v1356
    %v1605 = vpack.c.b16 %v1365, %v1357
    %v1606 = vpack.c.b16 %v1366, %v1358
    %v1607 = vpack.c.b16 %v1367, %v1359
    %v1608 = vpack.c.b16 %v1368, %v1360
    %v1609 = vpack.c.b16 %v1369, %v1361
    %v1610 = vpack.c.b16 %v1378, %v1370
    %v1611 = vpack.c.b16 %v1379, %v1371
    %v1612 = vpack.c.b16 %v1380, %v1372
    %v1613 = vpack.c.b16 %v1381, %v1373
    %v1614 = vpack.c.b16 %v1382, %v1374
    %v1615 = vpack.c.b16 %v1383, %v1375
    %v1616 = vpack.c.b16 %v1384, %v1376
    %v1617 = vpack.c.b16 %v1385, %v1377
    %v1618 = vpack.c.b16 %v1394, %v1386
    %v1619 = vpack.c.b16 %v1395, %v1387
    %v1620 = vpack.c.b16 %v1396, %v1388
    %v1621 = vpack.c.b16 %v1397, %v1389
    %v1622 = vpack.c.b16 %v1398, %v1390
    %v1623 = vpack.c.b16 %v1399, %v1391
    %v1624 = vpack.c.b16 %v1400, %v1392
    %v1625 = vpack.c.b16 %v1401, %v1393
    %v1626 = vpack.c.b16 %v1410, %v1402
    %v1627 = vpack.c.b16 %v1411, %v1403
    %v1628 = vpack.c.b16 %v1412, %v1404
    %v1629 = vpack.c.b16 %v1413, %v1405
    %v1630 = vpack.c.b16 %v1414, %v1406
    %v1631 = vpack.c.b16 %v1415, %v1407
    %v1632 = vpack.c.b16 %v1416, %v1408
    %v1633 = vpack.c.b16 %v1417, %v1409
    %v1634 = vpack.c.b16 %v1426, %v1418
    %v1635 = vpack.c.b16 %v1427, %v1419
    %v1636 = vpack.c.b16 %v1428, %v1420
    %v1637 = vpack.c.b16 %v1429, %v1421
    %v1638 = vpack.c.b16 %v1430, %v1422
    %v1639 = vpack.c.b16 %v1431, %v1423
    %v1640 = vpack.c.b16 %v1432, %v1424
    %v1641 = vpack.c.b16 %v1433, %v1425
    %v1642 = vpack.c.b16 %v1442, %v1434
    %v1643 = vpack.c.b16 %v1443, %v1435
    %v1644 = vpack.c.b16 %v1444, %v1436
    %v1645 = vpack.c.b16 %v1445, %v1437
    %v1646 = vpack.c.b16 %v1446, %v1438
    %v1647 = vpack.c.b16 %v1447, %v1439
    %v1648 = vpack.c.b16 %v1448, %v1440
    %v1649 = vpack.c.b16 %v1449, %v1441
    %v1650 = vpack.c.b16 %v1458, %v1450
    %v1651 = vpack.c.b16 %v1459, %v1451
    %v1652 = vpack.c.b16 %v1460, %v1452
    %v1653 = vpack.c.b16 %v1461, %v1453
    %v1654 = vpack.c.b16 %v1462, %v1454
    %v1655 = vpack.c.b16 %v1463, %v1455
    %v1656 = vpack.c.b16 %v1464, %v1456
    %v1657 = vpack.c.b16 %v1465, %v1457
    %v1658 = vpack.c.b16 %v1474, %v1466
    %v1659 = vpack.c.b16 %v1475, %v1467
    %v1660 = vpack.c.b16 %v1476, %v1468
    %v1661 = vpack.c.b16 %v1477, %v1469
    %v1662 = vpack.c.b16 %v1478, %v1470
    %v1663 = vpack.c.b16 %v1479, %v1471
    %v1664 = vpack.c.b16 %v1480, %v1472
    %v1665 = vpack.c.b16 %v1481, %v1473
    %v1666 = vpack.c.b16 %v1490, %v1482
    %v1667 = vpack.c.b16 %v1491, %v1483
    %v1668 = vpack.c.b16 %v1492, %v1484
    %v1669 = vpack.c.b16 %v1493, %v1485
    %v1670 = vpack.c.b16 %v1494, %v1486
    %v1671 = vpack.c.b16 %v1495, %v1487
    %v1672 = vpack.c.b16 %v1496, %v1488
    %v1673 = vpack.c.b16 %v1497, %v1489
    %v1674 = vpack.c.b16 %v1506, %v1498
    %v1675 = vpack.c.b16 %v1507, %v1499
    %v1676 = vpack.c.b16 %v1508, %v1500
    %v1677 = vpack.c.b16 %v1509, %v1501
    %v1678 = vpack.c.b16 %v1510, %v1502
    %v1679 = vpack.c.b16 %v1511, %v1503
    %v1680 = vpack.c.b16 %v1512, %v1504
    %v1681 = vpack.c.b16 %v1513, %v1505
    %v1682 = vpack.c.b16 %v1522, %v1514
    %v1683 = vpack.c.b16 %v1523, %v1515
    %v1684 = vpack.c.b16 %v1524, %v1516
    %v1685 = vpack.c.b16 %v1525, %v1517
    %v1686 = vpack.c.b16 %v1526, %v1518
    %v1687 = vpack.c.b16 %v1527, %v1519
    %v1688 = vpack.c.b16 %v1528, %v1520
    %v1689 = vpack.c.b16 %v1529, %v1521
    %v1690 = vpack.c.b16 %v1538, %v1530
    %v1691 = vpack.c.b16 %v1539, %v1531
    %v1692 = vpack.c.b16 %v1540, %v1532
    %v1693 = vpack.c.b16 %v1541, %v1533
    %v1694 = vpack.c.b16 %v1542, %v1534
    %v1695 = vpack.c.b16 %v1543, %v1535
    %v1696 = vpack.c.b16 %v1544, %v1536
    %v1697 = vpack.c.b16 %v1545, %v1537
    %v1698 = vpack.c.b16 %v1554, %v1546
    %v1699 = vpack.c.b16 %v1555, %v1547
    %v1700 = vpack.c.b16 %v1556, %v1548
    %v1701 = vpack.c.b16 %v1557, %v1549
    %v1702 = vpack.c.b16 %v1558, %v1550
    %v1703 = vpack.c.b16 %v1559, %v1551
    %v1704 = vpack.c.b16 %v1560, %v1552
    %v1705 = vpack.c.b16 %v1561, %v1553
    %v1706 = vpack.c.b16 %v1570, %v1562
    %v1707 = vpack.c.b16 %v1571, %v1563
    %v1708 = vpack.c.b16 %v1572, %v1564
    %v1709 = vpack.c.b16 %v1573, %v1565
    %v1710 = vpack.c.b16 %v1574, %v1566
    %v1711 = vpack.c.b16 %v1575, %v1567
    %v1712 = vpack.c.b16 %v1576, %v1568
    %v1713 = vpack.c.b16 %v1577, %v1569
    %v1714 = vpack.c.b16 %v1586, %v1578
    %v1715 = vpack.c.b16 %v1587, %v1579
    %v1716 = vpack.c.b16 %v1588, %v1580
    %v1717 = vpack.c.b16 %v1589, %v1581
    %v1718 = vpack.c.b16 %v1590, %v1582
    %v1719 = vpack.c.b16 %v1591, %v1583
    %v1720 = vpack.c.b16 %v1592, %v1584
    %v1721 = vpack.c.b16 %v1593, %v1585
    %1850 = vmatprep.subr.bf16.mxu0 %v1595
    %1851 = vmatpush1.bf16.msra.mxu0 %v1594
    %1852 = vmatprep.subr.bf16.mxu0 %v1603
    %1853 = vmatpush1.bf16.msra.mxu0 %v1602
    %1854 = vmatprep.subr.bf16.mxu0 %v1611
    %1855 = vmatpush1.bf16.msra.mxu0 %v1610
    %1856 = vmatprep.subr.bf16.mxu0 %v1619
    %1857 = vmatpush1.bf16.msra.mxu0 %v1618
    %1858 = vmatprep.subr.bf16.mxu0 %v1627
    %1859 = vmatpush1.bf16.msra.mxu0 %v1626
    %1860 = vmatprep.subr.bf16.mxu0 %v1635
    %1861 = vmatpush1.bf16.msra.mxu0 %v1634
    %1862 = vmatprep.subr.bf16.mxu0 %v1643
    %1863 = vmatpush1.bf16.msra.mxu0 %v1642
    %1864 = vmatprep.subr.bf16.mxu0 %v1651
    %1865 = vmatpush1.bf16.msra.mxu0 %v1650
    %1866 = vmatprep.subr.bf16.mxu0 %v1659
    %1867 = vmatpush1.bf16.msra.mxu0 %v1658
    %1868 = vmatprep.subr.bf16.mxu0 %v1667
    %1869 = vmatpush1.bf16.msra.mxu0 %v1666
    %1870 = vmatprep.subr.bf16.mxu0 %v1675
    %1871 = vmatpush1.bf16.msra.mxu0 %v1674
    %1872 = vmatprep.subr.bf16.mxu0 %v1683
    %1873 = vmatpush1.bf16.msra.mxu0 %v1682
    %1874 = vmatprep.subr.bf16.mxu0 %v1691
    %1875 = vmatpush1.bf16.msra.mxu0 %v1690
    %1876 = vmatprep.subr.bf16.mxu0 %v1699
    %1877 = vmatpush1.bf16.msra.mxu0 %v1698
    %1878 = vmatprep.subr.bf16.mxu0 %v1707
    %1879 = vmatpush1.bf16.msra.mxu0 %v1706
    %1880 = vmatprep.subr.bf16.mxu0 %v1715
    %1881 = vmatpush1.bf16.msra.mxu0 %v1714
    %1882 = vmatprep.mubr.bf16.mxu0 %v1039
    %1883 = vmatmul.mubr.bf16.gmra.mrb[0].mxu0 %v1038
    %v1884 = vpop.f32.mrb[0].mxu0
    %v1885 = vadd.f32 %v1173, %v1884
    %v1886 = vpop.f32.mrb[0].mxu0
    %v1887 = vadd.f32 %v1177, %v1886
    %v1888 = vpop.f32.mrb[0].mxu0
    %v1889 = vpop.f32.mrb[0].mxu0
    %1890 = vdwg.mxu0
    %1891 = vmatprep.subr.bf16.mxu0 %v1597
    %1892 = vmatpush1.bf16.msra.mxu0 %v1596
    %1893 = vmatprep.subr.bf16.mxu0 %v1605
    %1894 = vmatpush1.bf16.msra.mxu0 %v1604
    %1895 = vmatprep.subr.bf16.mxu0 %v1613
    %1896 = vmatpush1.bf16.msra.mxu0 %v1612
    %1897 = vmatprep.subr.bf16.mxu0 %v1621
    %1898 = vmatpush1.bf16.msra.mxu0 %v1620
    %1899 = vmatprep.subr.bf16.mxu0 %v1629
    %1900 = vmatpush1.bf16.msra.mxu0 %v1628
    %1901 = vmatprep.subr.bf16.mxu0 %v1637
    %1902 = vmatpush1.bf16.msra.mxu0 %v1636
    %1903 = vmatprep.subr.bf16.mxu0 %v1645
    %1904 = vmatpush1.bf16.msra.mxu0 %v1644
    %1905 = vmatprep.subr.bf16.mxu0 %v1653
    %1906 = vmatpush1.bf16.msra.mxu0 %v1652
    %1907 = vmatprep.subr.bf16.mxu0 %v1661
    %1908 = vmatpush1.bf16.msra.mxu0 %v1660
    %1909 = vmatprep.subr.bf16.mxu0 %v1669
    %1910 = vmatpush1.bf16.msra.mxu0 %v1668
    %1911 = vmatprep.subr.bf16.mxu0 %v1677
    %1912 = vmatpush1.bf16.msra.mxu0 %v1676
    %1913 = vmatprep.subr.bf16.mxu0 %v1685
    %1914 = vmatpush1.bf16.msra.mxu0 %v1684
    %1915 = vmatprep.subr.bf16.mxu0 %v1693
    %1916 = vmatpush1.bf16.msra.mxu0 %v1692
    %1917 = vmatprep.subr.bf16.mxu0 %v1701
    %1918 = vmatpush1.bf16.msra.mxu0 %v1700
    %1919 = vmatprep.subr.bf16.mxu0 %v1709
    %1920 = vmatpush1.bf16.msra.mxu0 %v1708
    %1921 = vmatprep.subr.bf16.mxu0 %v1717
    %1922 = vmatpush1.bf16.msra.mxu0 %v1716
    %1923 = vmatprep.mubr.bf16.mxu0 %v1039
    %1924 = vmatmul.mubr.bf16.gmra.mrb[0].mxu0 %v1038
    %v1925 = vpop.f32.mrb[0].mxu0
    %v1926 = vadd.f32 %v1181, %v1925
    %v1927 = vpop.f32.mrb[0].mxu0
    %v1928 = vadd.f32 %v1185, %v1927
    %v1929 = vpop.f32.mrb[0].mxu0
    %v1930 = vpop.f32.mrb[0].mxu0
    %1931 = vdwg.mxu0
    %1932 = vmatprep.subr.bf16.mxu0 %v1599
    %1933 = vmatpush1.bf16.msra.mxu0 %v1598
    %1934 = vmatprep.subr.bf16.mxu0 %v1607
    %1935 = vmatpush1.bf16.msra.mxu0 %v1606
    %1936 = vmatprep.subr.bf16.mxu0 %v1615
    %1937 = vmatpush1.bf16.msra.mxu0 %v1614
    %1938 = vmatprep.subr.bf16.mxu0 %v1623
    %1939 = vmatpush1.bf16.msra.mxu0 %v1622
    %1940 = vmatprep.subr.bf16.mxu0 %v1631
    %1941 = vmatpush1.bf16.msra.mxu0 %v1630
    %1942 = vmatprep.subr.bf16.mxu0 %v1639
    %1943 = vmatpush1.bf16.msra.mxu0 %v1638
    %1944 = vmatprep.subr.bf16.mxu0 %v1647
    %1945 = vmatpush1.bf16.msra.mxu0 %v1646
    %1946 = vmatprep.subr.bf16.mxu0 %v1655
    %1947 = vmatpush1.bf16.msra.mxu0 %v1654
    %1948 = vmatprep.subr.bf16.mxu0 %v1663
    %1949 = vmatpush1.bf16.msra.mxu0 %v1662
    %1950 = vmatprep.subr.bf16.mxu0 %v1671
    %1951 = vmatpush1.bf16.msra.mxu0 %v1670
    %1952 = vmatprep.subr.bf16.mxu0 %v1679
    %1953 = vmatpush1.bf16.msra.mxu0 %v1678
    %1954 = vmatprep.subr.bf16.mxu0 %v1687
    %1955 = vmatpush1.bf16.msra.mxu0 %v1686
    %1956 = vmatprep.subr.bf16.mxu0 %v1695
    %1957 = vmatpush1.bf16.msra.mxu0 %v1694
    %1958 = vmatprep.subr.bf16.mxu0 %v1703
    %1959 = vmatpush1.bf16.msra.mxu0 %v1702
    %1960 = vmatprep.subr.bf16.mxu0 %v1711
    %1961 = vmatpush1.bf16.msra.mxu0 %v1710
    %1962 = vmatprep.subr.bf16.mxu0 %v1719
    %1963 = vmatpush1.bf16.msra.mxu0 %v1718
    %1964 = vmatprep.mubr.bf16.mxu0 %v1039
    %1965 = vmatmul.mubr.bf16.gmra.mrb[0].mxu0 %v1038
    %v1966 = vpop.f32.mrb[0].mxu0
    %v1967 = vadd.f32 %v1189, %v1966
    %v1968 = vpop.f32.mrb[0].mxu0
    %v1969 = vadd.f32 %v1193, %v1968
    %v1970 = vpop.f32.mrb[0].mxu0
    %v1971 = vpop.f32.mrb[0].mxu0
    %1972 = vdwg.mxu0
    %1973 = vmatprep.subr.bf16.mxu0 %v1601
    %1974 = vmatpush1.bf16.msra.mxu0 %v1600
    %1975 = vmatprep.subr.bf16.mxu0 %v1609
    %1976 = vmatpush1.bf16.msra.mxu0 %v1608
    %1977 = vmatprep.subr.bf16.mxu0 %v1617
    %1978 = vmatpush1.bf16.msra.mxu0 %v1616
    %1979 = vmatprep.subr.bf16.mxu0 %v1625
    %1980 = vmatpush1.bf16.msra.mxu0 %v1624
    %1981 = vmatprep.subr.bf16.mxu0 %v1633
    %1982 = vmatpush1.bf16.msra.mxu0 %v1632
    %1983 = vmatprep.subr.bf16.mxu0 %v1641
    %1984 = vmatpush1.bf16.msra.mxu0 %v1640
    %1985 = vmatprep.subr.bf16.mxu0 %v1649
    %1986 = vmatpush1.bf16.msra.mxu0 %v1648
    %1987 = vmatprep.subr.bf16.mxu0 %v1657
    %1988 = vmatpush1.bf16.msra.mxu0 %v1656
    %1989 = vmatprep.subr.bf16.mxu0 %v1665
    %1990 = vmatpush1.bf16.msra.mxu0 %v1664
    %1991 = vmatprep.subr.bf16.mxu0 %v1673
    %1992 = vmatpush1.bf16.msra.mxu0 %v1672
    %1993 = vmatprep.subr.bf16.mxu0 %v1681
    %1994 = vmatpush1.bf16.msra.mxu0 %v1680
    %1995 = vmatprep.subr.bf16.mxu0 %v1689
    %1996 = vmatpush1.bf16.msra.mxu0 %v1688
    %1997 = vmatprep.subr.bf16.mxu0 %v1697
    %1998 = vmatpush1.bf16.msra.mxu0 %v1696
    %1999 = vmatprep.subr.bf16.mxu0 %v1705
    %2000 = vmatpush1.bf16.msra.mxu0 %v1704
    %2001 = vmatprep.subr.bf16.mxu0 %v1713
    %2002 = vmatpush1.bf16.msra.mxu0 %v1712
    %2003 = vmatprep.subr.bf16.mxu0 %v1721
    %2004 = vmatpush1.bf16.msra.mxu0 %v1720
    %2005 = vmatprep.mubr.bf16.mxu0 %v1039
    %2006 = vmatmul.mubr.bf16.gmra.mrb[0].mxu0 %v1038
    %v2007 = vpop.f32.mrb[0].mxu0
    %v2008 = vadd.f32 %v1197, %v2007
    %v2009 = vpop.f32.mrb[0].mxu0
    %v2010 = vadd.f32 %v1201, %v2009
    %v2011 = vpop.f32.mrb[0].mxu0
    %v2012 = vpop.f32.mrb[0].mxu0
    %2013 = vdwg.mxu0
    %2014 = vst [vmem:[#allocation8] sm:$0xff] %v1885
    %2015 = vst [vmem:[#allocation8 + $0x8] sm:$0xff] %v1887
    %2016 = vst [vmem:[#allocation8 + $0x10] sm:$0xff] %v1926
    %2017 = vst [vmem:[#allocation8 + $0x18] sm:$0xff] %v1928
    %2018 = vst [vmem:[#allocation8 + $0x20] sm:$0xff] %v1967
    %2019 = vst [vmem:[#allocation8 + $0x28] sm:$0xff] %v1969
    %2020 = vst [vmem:[#allocation8 + $0x30] sm:$0xff] %v2008
    %2021 = vst [vmem:[#allocation8 + $0x38] sm:$0xff] %v2010
    // Predicated region
    $region34: #{tpu_custom_call.1} parent=1 // pred_check
      _
    $region35: #{tpu_custom_call.1} parent=1 // pred_check_branch
      %2023 = sbr.rel (0) target = $region37
    $region36: #{tpu_custom_call.1} parent=1 // pred_region
      %s2025 = ssub.s32 1024, 1024
      %2026 = vsyncadd [#allocation4], %s2025
      %s2028 = sshll.u32 [#allocation8], 4
      %s2029 = int_to_ptr.vmem [resolvable:$true] %s2028
      %2031 = dma.vmem_to_hbm [thread:$0]  %s2029, 1024, %s5, [#allocation4]
    $region37: #{tpu_custom_call.1} parent=1 // pred_fallthru
      _
    // Predicated region
    $region38: #{tpu_custom_call.1} parent=1 // pred_check
      _
    $region39: #{tpu_custom_call.1} parent=1 // pred_check_branch
      %2033 = sbr.rel (0) target = $region41
    $region40: #{tpu_custom_call.1} parent=1 // pred_region
      %2034 = dma.done [#allocation4], 1024
    $region41: #{tpu_custom_call.1} parent=1 // pred_fallthru
      _
    %2035 = vsyncpa [#allocation3], 1
    %2036 = vsyncpa [#allocation6], 1
    %2037 = vsyncpa [#allocation4], 1

</llo_original>
